<compile_context>
chip_gen: v7x
topology: tpu7x:2x2x1
jax: 0.10.0
libtpu: 0.0.40
codegen_flags: <defaults>
</compile_context>

<pallas_src>
import jax
import jax.numpy as jnp
from jax.experimental import pallas as pl
from jax.experimental.pallas import tpu as pltpu

HIDDEN = 256


# ---------------------------------------------------------------------------
# Kernel
# ---------------------------------------------------------------------------
def qnet_kernel(s_ref, a_ref,
                ws1_ref, wa1_ref, b1_ref,          # fused layer 1 (both heads)
                w2_ref, b2_ref, u2_ref, c2_ref,    # layer 2 (q1 / q2)
                w3_ref, b3_ref, u3_ref, c3_ref,    # layer 3 (q1 / q2)
                w4a_ref, w4b_ref, b4_ref,          # fused layer 4 -> (B, 2)
                q_ref):
    f32 = jnp.float32
    bf16 = jnp.bfloat16

    s = s_ref[...].astype(bf16)
    a = a_ref[...].astype(bf16)

    # Layer 1, both heads in one wide matmul: columns [0:256]=q1, [256:512]=q2.
    h1 = (jnp.dot(s, ws1_ref[...], preferred_element_type=f32)
          + jnp.dot(a, wa1_ref[...], preferred_element_type=f32)
          + b1_ref[...])
    h1 = jnp.maximum(h1, 0.0)                      # f32 elementwise (v5e-safe)
    h_q1 = h1[:, :HIDDEN].astype(bf16)
    h_q2 = h1[:, HIDDEN:].astype(bf16)

    def hidden_layer(h, w_ref, b_ref):
        z = jnp.dot(h, w_ref[...], preferred_element_type=f32) + b_ref[...]
        return jnp.maximum(z, 0.0).astype(bf16)

    h_q1 = hidden_layer(h_q1, w2_ref, b2_ref)
    h_q2 = hidden_layer(h_q2, u2_ref, c2_ref)
    h_q1 = hidden_layer(h_q1, w3_ref, b3_ref)
    h_q2 = hidden_layer(h_q2, u3_ref, c3_ref)

    # Final layer of both heads fused into a single lane-dense (B, 2) result.
    # w4a has q1's weights in column 0 (zeros in col 1); w4b the reverse.
    q_ref[...] = (jnp.dot(h_q1, w4a_ref[...], preferred_element_type=f32)
                  + jnp.dot(h_q2, w4b_ref[...], preferred_element_type=f32)
                  + b4_ref[...])


# ---------------------------------------------------------------------------
# Parameter init (matches PyTorch xavier_uniform_ + zero bias) and packing
# ---------------------------------------------------------------------------
def xavier_uniform(key, fan_in, fan_out, dtype=jnp.float32):
    limit = (6.0 / (fan_in + fan_out)) ** 0.5
    return jax.random.uniform(key, (fan_in, fan_out), dtype,
                              minval=-limit, maxval=limit)


def init_qnetwork_params(key, num_inputs, num_actions, hidden=HIDDEN):
    """Raw f32 per-head params: heads[h] = [(w1,b1),(w2,b2),(w3,b3),(w4,b4)]."""
    n_in = num_inputs + num_actions
    dims = [n_in, hidden, hidden, hidden, 1]
    keys = jax.random.split(key, 8)
    heads, ki = [], 0
    for _ in range(2):
        layers = []
        for li in range(4):
            w = xavier_uniform(keys[ki], dims[li], dims[li + 1])
            ki += 1
            b = jnp.zeros((dims[li + 1],), jnp.float32)
            layers.append((w, b))
        heads.append(layers)
    return heads


def pack_params(heads, num_inputs, num_actions, hidden=HIDDEN):
    """Build the fused, bf16-weight kernel parameter list."""
    (w1, b1), (w2, b2), (w3, b3), (w4, b4) = heads[0]
    (u1, c1), (u2, c2), (u3, c3), (u4, c4) = heads[1]
    bf16 = jnp.bfloat16

    # Fused layer 1: [W1 | U1] -> (n_in, 512), split into state/action row blocks.
    w1f = jnp.concatenate([w1, u1], axis=1)
    ws1 = w1f[:num_inputs].astype(bf16)            # (n_s, 512)
    wa1 = w1f[num_inputs:].astype(bf16)            # (n_a, 512)
    b1f = jnp.concatenate([b1, c1])[None, :]       # (1, 512) f32

    # Fused layer 4: two (256, 2) weights whose sum is the block-diag (512, 2).
    w4a = jnp.zeros((hidden, 2), jnp.float32).at[:, 0].set(w4[:, 0]).astype(bf16)
    w4b = jnp.zeros((hidden, 2), jnp.float32).at[:, 1].set(u4[:, 0]).astype(bf16)
    b4f = jnp.stack([b4[0], c4[0]])[None, :]       # (1, 2) f32

    return [ws1, wa1, b1f,
            w2.astype(bf16), b2[None, :], u2.astype(bf16), c2[None, :],
            w3.astype(bf16), b3[None, :], u3.astype(bf16), c3[None, :],
            w4a, w4b, b4f]


# ---------------------------------------------------------------------------
# Wrapper
# ---------------------------------------------------------------------------
def _pick_batch_tile(batch):
    if batch <= 256:
        return batch                               # one grid step, full batch
    for tb in (256, 128, 64, 32, 16, 8):
        if batch % tb == 0:
            return tb
    return batch                                   # fallback: monolithic


@jax.jit
def qnetwork_forward(state, action, packed):
    B, n_s = state.shape
    n_a = action.shape[1]
    tb = _pick_batch_tile(B)
    grid = (B // tb,)

    row = lambda i: (i, 0)                         # batch-tiled activations
    const = lambda i: (0, 0)                       # weights stay VMEM-resident

    in_specs = [pl.BlockSpec((tb, n_s), row),
                pl.BlockSpec((tb, n_a), row)]
    in_specs += [pl.BlockSpec(p.shape, const) for p in packed]

    q = pl.pallas_call(
        qnet_kernel,
        out_shape=jax.ShapeDtypeStruct((B, 2), jnp.float32),
        grid=grid,
        in_specs=in_specs,
        out_specs=pl.BlockSpec((tb, 2), row),
        compiler_params=pltpu.CompilerParams(
            dimension_semantics=("parallel",)),    # batch tiles are independent
    )(state, action, *packed)

    return q[:, 0:1], q[:, 1:2]


# ---------------------------------------------------------------------------
# Pure-JAX reference (mirrors the kernel's bf16-weight / f32-accum math)
# ---------------------------------------------------------------------------
def qnetwork_forward_ref(state, action, packed):
    (ws1, wa1, b1f,
     w2, b2, u2, c2,
     w3, b3, u3, c3,
     w4a, w4b, b4f) = packed
    f32, bf16 = jnp.float32, jnp.bfloat16

    s = state.astype(bf16)
    a = action.astype(bf16)
    h1 = (jnp.dot(s, ws1, preferred_element_type=f32)
          + jnp.dot(a, wa1, preferred_element_type=f32) + b1f)
    h1 = jnp.maximum(h1, 0.0)
    hq1 = h1[:, :HIDDEN].astype(bf16)
    hq2 = h1[:, HIDDEN:].astype(bf16)

    def hl(h, w, b):
        z = jnp.dot(h, w, preferred_element_type=f32) + b
        return jnp.maximum(z, 0.0).astype(bf16)

    hq1 = hl(hl(hq1, w2, b2), w3, b3)
    hq2 = hl(hl(hq2, u2, c2), u3, c3)
    q = (jnp.dot(hq1, w4a, preferred_element_type=f32)
         + jnp.dot(hq2, w4b, preferred_element_type=f32) + b4f)
    return q[:, 0:1], q[:, 1:2]


if __name__ == "__main__":
    B, num_inputs, num_actions = 8, 16, 8

    key = jax.random.PRNGKey(0)
    k_param, k_state, k_action = jax.random.split(key, 3)

    heads = init_qnetwork_params(k_param, num_inputs, num_actions)
    packed = pack_params(heads, num_inputs, num_actions)
    state = jax.random.normal(k_state, (B, num_inputs), jnp.float32)
    action = jax.random.normal(k_action, (B, num_actions), jnp.float32)

    q1, q2 = qnetwork_forward(state, action, packed)
    jax.block_until_ready((q1, q2))

    r1, r2 = qnetwork_forward_ref(state, action, packed)
    assert q1.shape == (B, 1) and q2.shape == (B, 1)
    assert jnp.allclose(q1, r1, atol=1e-2, rtol=1e-2)
    assert jnp.allclose(q2, r2, atol=1e-2, rtol=1e-2)

    print("KERNEL_OK")
</pallas_src>

<mosaic_0001>
module attributes {stable_mosaic.version = 11 : i64} {
  func.func @qnet_kernel(%arg0: i32, %arg1: memref<8x16xf32, #tpu.memory_space<vmem>>, %arg2: memref<8x8xf32, #tpu.memory_space<vmem>>, %arg3: memref<16x512xbf16, #tpu.memory_space<vmem>>, %arg4: memref<8x512xbf16, #tpu.memory_space<vmem>>, %arg5: memref<1x512xf32, #tpu.memory_space<vmem>>, %arg6: memref<256x256xbf16, #tpu.memory_space<vmem>>, %arg7: memref<1x256xf32, #tpu.memory_space<vmem>>, %arg8: memref<256x256xbf16, #tpu.memory_space<vmem>>, %arg9: memref<1x256xf32, #tpu.memory_space<vmem>>, %arg10: memref<256x256xbf16, #tpu.memory_space<vmem>>, %arg11: memref<1x256xf32, #tpu.memory_space<vmem>>, %arg12: memref<256x256xbf16, #tpu.memory_space<vmem>>, %arg13: memref<1x256xf32, #tpu.memory_space<vmem>>, %arg14: memref<256x2xbf16, #tpu.memory_space<vmem>>, %arg15: memref<256x2xbf16, #tpu.memory_space<vmem>>, %arg16: memref<1x2xf32, #tpu.memory_space<vmem>>, %arg17: memref<8x2xf32, #tpu.memory_space<vmem>>) attributes {dimension_semantics = [#tpu.dimension_semantics<parallel>], iteration_bounds = array<i64: 1>, scalar_prefetch = 0 : i64, scratch_operands = 0 : i64, tpu.core_type = #tpu.core_type<tc>, window_params = [{transform_indices = @transform_0, window_bounds = array<i64: 8, 16>}, {transform_indices = @transform_1, window_bounds = array<i64: 8, 8>}, {pipeline_mode = #tpu.pipeline_mode<synchronous>, transform_indices = @transform_2, window_bounds = array<i64: 16, 512>}, {pipeline_mode = #tpu.pipeline_mode<synchronous>, transform_indices = @transform_3, window_bounds = array<i64: 8, 512>}, {pipeline_mode = #tpu.pipeline_mode<synchronous>, transform_indices = @transform_4, window_bounds = array<i64: 1, 512>}, {pipeline_mode = #tpu.pipeline_mode<synchronous>, transform_indices = @transform_5, window_bounds = array<i64: 256, 256>}, {pipeline_mode = #tpu.pipeline_mode<synchronous>, transform_indices = @transform_6, window_bounds = array<i64: 1, 256>}, {pipeline_mode = #tpu.pipeline_mode<synchronous>, transform_indices = @transform_7, window_bounds = array<i64: 256, 256>}, {pipeline_mode = #tpu.pipeline_mode<synchronous>, transform_indices = @transform_8, window_bounds = array<i64: 1, 256>}, {pipeline_mode = #tpu.pipeline_mode<synchronous>, transform_indices = @transform_9, window_bounds = array<i64: 256, 256>}, {pipeline_mode = #tpu.pipeline_mode<synchronous>, transform_indices = @transform_10, window_bounds = array<i64: 1, 256>}, {pipeline_mode = #tpu.pipeline_mode<synchronous>, transform_indices = @transform_11, window_bounds = array<i64: 256, 256>}, {pipeline_mode = #tpu.pipeline_mode<synchronous>, transform_indices = @transform_12, window_bounds = array<i64: 1, 256>}, {pipeline_mode = #tpu.pipeline_mode<synchronous>, transform_indices = @transform_13, window_bounds = array<i64: 256, 2>}, {pipeline_mode = #tpu.pipeline_mode<synchronous>, transform_indices = @transform_14, window_bounds = array<i64: 256, 2>}, {pipeline_mode = #tpu.pipeline_mode<synchronous>, transform_indices = @transform_15, window_bounds = array<i64: 1, 2>}, {transform_indices = @transform_16, window_bounds = array<i64: 8, 2>}]} {
    %c0 = arith.constant 0 : index
    %c0_0 = arith.constant 0 : index
    %0 = vector.load %arg1[%c0, %c0_0] : memref<8x16xf32, #tpu.memory_space<vmem>>, vector<8x16xf32>
    %1 = arith.truncf %0 : vector<8x16xf32> to vector<8x16xbf16>
    %c0_1 = arith.constant 0 : index
    %c0_2 = arith.constant 0 : index
    %2 = vector.load %arg2[%c0_1, %c0_2] : memref<8x8xf32, #tpu.memory_space<vmem>>, vector<8x8xf32>
    %3 = arith.truncf %2 : vector<8x8xf32> to vector<8x8xbf16>
    %c0_3 = arith.constant 0 : index
    %c0_4 = arith.constant 0 : index
    %4 = vector.load %arg3[%c0_3, %c0_4] : memref<16x512xbf16, #tpu.memory_space<vmem>>, vector<16x512xbf16>
    %cst = arith.constant dense<0.000000e+00> : vector<8x512xf32>
    %5 = tpu.matmul %1, %4, %cst {dimension_numbers = #tpu.dot_dimension_numbers<[1], [0], [0], [1], [0, 0, 1, 1], [], []>} : vector<8x16xbf16>, vector<16x512xbf16>, vector<8x512xf32> -> vector<8x512xf32>
    %c0_5 = arith.constant 0 : index
    %c0_6 = arith.constant 0 : index
    %6 = vector.load %arg4[%c0_5, %c0_6] : memref<8x512xbf16, #tpu.memory_space<vmem>>, vector<8x512xbf16>
    %cst_7 = arith.constant dense<0.000000e+00> : vector<8x512xf32>
    %7 = tpu.matmul %3, %6, %cst_7 {dimension_numbers = #tpu.dot_dimension_numbers<[1], [0], [0], [1], [0, 0, 1, 1], [], []>} : vector<8x8xbf16>, vector<8x512xbf16>, vector<8x512xf32> -> vector<8x512xf32>
    %8 = arith.addf %5, %7 : vector<8x512xf32>
    %c0_8 = arith.constant 0 : index
    %c0_9 = arith.constant 0 : index
    %9 = vector.load %arg5[%c0_8, %c0_9] : memref<1x512xf32, #tpu.memory_space<vmem>>, vector<1x512xf32>
    %10 = vector.broadcast %9 : vector<1x512xf32> to vector<8x512xf32>
    %11 = arith.addf %8, %10 : vector<8x512xf32>
    %cst_10 = arith.constant 0.000000e+00 : f32
    %12 = vector.broadcast %cst_10 : f32 to vector<8x512xf32>
    %13 = arith.maximumf %11, %12 : vector<8x512xf32>
    %14 = vector.extract_strided_slice %13 {offsets = [0, 0], sizes = [8, 256], strides = [1, 1]} : vector<8x512xf32> to vector<8x256xf32>
    %15 = arith.truncf %14 : vector<8x256xf32> to vector<8x256xbf16>
    %16 = vector.extract_strided_slice %13 {offsets = [0, 256], sizes = [8, 256], strides = [1, 1]} : vector<8x512xf32> to vector<8x256xf32>
    %17 = arith.truncf %16 : vector<8x256xf32> to vector<8x256xbf16>
    %c0_11 = arith.constant 0 : index
    %c0_12 = arith.constant 0 : index
    %18 = vector.load %arg6[%c0_11, %c0_12] : memref<256x256xbf16, #tpu.memory_space<vmem>>, vector<256x256xbf16>
    %cst_13 = arith.constant dense<0.000000e+00> : vector<8x256xf32>
    %19 = tpu.matmul %15, %18, %cst_13 {dimension_numbers = #tpu.dot_dimension_numbers<[1], [0], [0], [1], [0, 0, 1, 1], [], []>} : vector<8x256xbf16>, vector<256x256xbf16>, vector<8x256xf32> -> vector<8x256xf32>
    %c0_14 = arith.constant 0 : index
    %c0_15 = arith.constant 0 : index
    %20 = vector.load %arg7[%c0_14, %c0_15] : memref<1x256xf32, #tpu.memory_space<vmem>>, vector<1x256xf32>
    %21 = vector.broadcast %20 : vector<1x256xf32> to vector<8x256xf32>
    %22 = arith.addf %19, %21 : vector<8x256xf32>
    %cst_16 = arith.constant 0.000000e+00 : f32
    %23 = vector.broadcast %cst_16 : f32 to vector<8x256xf32>
    %24 = arith.maximumf %22, %23 : vector<8x256xf32>
    %25 = arith.truncf %24 : vector<8x256xf32> to vector<8x256xbf16>
    %c0_17 = arith.constant 0 : index
    %c0_18 = arith.constant 0 : index
    %26 = vector.load %arg8[%c0_17, %c0_18] : memref<256x256xbf16, #tpu.memory_space<vmem>>, vector<256x256xbf16>
    %cst_19 = arith.constant dense<0.000000e+00> : vector<8x256xf32>
    %27 = tpu.matmul %17, %26, %cst_19 {dimension_numbers = #tpu.dot_dimension_numbers<[1], [0], [0], [1], [0, 0, 1, 1], [], []>} : vector<8x256xbf16>, vector<256x256xbf16>, vector<8x256xf32> -> vector<8x256xf32>
    %c0_20 = arith.constant 0 : index
    %c0_21 = arith.constant 0 : index
    %28 = vector.load %arg9[%c0_20, %c0_21] : memref<1x256xf32, #tpu.memory_space<vmem>>, vector<1x256xf32>
    %29 = vector.broadcast %28 : vector<1x256xf32> to vector<8x256xf32>
    %30 = arith.addf %27, %29 : vector<8x256xf32>
    %cst_22 = arith.constant 0.000000e+00 : f32
    %31 = vector.broadcast %cst_22 : f32 to vector<8x256xf32>
    %32 = arith.maximumf %30, %31 : vector<8x256xf32>
    %33 = arith.truncf %32 : vector<8x256xf32> to vector<8x256xbf16>
    %c0_23 = arith.constant 0 : index
    %c0_24 = arith.constant 0 : index
    %34 = vector.load %arg10[%c0_23, %c0_24] : memref<256x256xbf16, #tpu.memory_space<vmem>>, vector<256x256xbf16>
    %cst_25 = arith.constant dense<0.000000e+00> : vector<8x256xf32>
    %35 = tpu.matmul %25, %34, %cst_25 {dimension_numbers = #tpu.dot_dimension_numbers<[1], [0], [0], [1], [0, 0, 1, 1], [], []>} : vector<8x256xbf16>, vector<256x256xbf16>, vector<8x256xf32> -> vector<8x256xf32>
    %c0_26 = arith.constant 0 : index
    %c0_27 = arith.constant 0 : index
    %36 = vector.load %arg11[%c0_26, %c0_27] : memref<1x256xf32, #tpu.memory_space<vmem>>, vector<1x256xf32>
    %37 = vector.broadcast %36 : vector<1x256xf32> to vector<8x256xf32>
    %38 = arith.addf %35, %37 : vector<8x256xf32>
    %cst_28 = arith.constant 0.000000e+00 : f32
    %39 = vector.broadcast %cst_28 : f32 to vector<8x256xf32>
    %40 = arith.maximumf %38, %39 : vector<8x256xf32>
    %41 = arith.truncf %40 : vector<8x256xf32> to vector<8x256xbf16>
    %c0_29 = arith.constant 0 : index
    %c0_30 = arith.constant 0 : index
    %42 = vector.load %arg12[%c0_29, %c0_30] : memref<256x256xbf16, #tpu.memory_space<vmem>>, vector<256x256xbf16>
    %cst_31 = arith.constant dense<0.000000e+00> : vector<8x256xf32>
    %43 = tpu.matmul %33, %42, %cst_31 {dimension_numbers = #tpu.dot_dimension_numbers<[1], [0], [0], [1], [0, 0, 1, 1], [], []>} : vector<8x256xbf16>, vector<256x256xbf16>, vector<8x256xf32> -> vector<8x256xf32>
    %c0_32 = arith.constant 0 : index
    %c0_33 = arith.constant 0 : index
    %44 = vector.load %arg13[%c0_32, %c0_33] : memref<1x256xf32, #tpu.memory_space<vmem>>, vector<1x256xf32>
    %45 = vector.broadcast %44 : vector<1x256xf32> to vector<8x256xf32>
    %46 = arith.addf %43, %45 : vector<8x256xf32>
    %cst_34 = arith.constant 0.000000e+00 : f32
    %47 = vector.broadcast %cst_34 : f32 to vector<8x256xf32>
    %48 = arith.maximumf %46, %47 : vector<8x256xf32>
    %49 = arith.truncf %48 : vector<8x256xf32> to vector<8x256xbf16>
    %c0_35 = arith.constant 0 : index
    %c0_36 = arith.constant 0 : index
    %50 = vector.load %arg14[%c0_35, %c0_36] : memref<256x2xbf16, #tpu.memory_space<vmem>>, vector<256x2xbf16>
    %cst_37 = arith.constant dense<0.000000e+00> : vector<8x2xf32>
    %51 = tpu.matmul %41, %50, %cst_37 {dimension_numbers = #tpu.dot_dimension_numbers<[1], [0], [0], [1], [0, 0, 1, 1], [], []>} : vector<8x256xbf16>, vector<256x2xbf16>, vector<8x2xf32> -> vector<8x2xf32>
    %c0_38 = arith.constant 0 : index
    %c0_39 = arith.constant 0 : index
    %52 = vector.load %arg15[%c0_38, %c0_39] : memref<256x2xbf16, #tpu.memory_space<vmem>>, vector<256x2xbf16>
    %cst_40 = arith.constant dense<0.000000e+00> : vector<8x2xf32>
    %53 = tpu.matmul %49, %52, %cst_40 {dimension_numbers = #tpu.dot_dimension_numbers<[1], [0], [0], [1], [0, 0, 1, 1], [], []>} : vector<8x256xbf16>, vector<256x2xbf16>, vector<8x2xf32> -> vector<8x2xf32>
    %54 = arith.addf %51, %53 : vector<8x2xf32>
    %c0_41 = arith.constant 0 : index
    %c0_42 = arith.constant 0 : index
    %55 = vector.load %arg16[%c0_41, %c0_42] : memref<1x2xf32, #tpu.memory_space<vmem>>, vector<1x2xf32>
    %56 = vector.broadcast %55 : vector<1x2xf32> to vector<8x2xf32>
    %57 = arith.addf %54, %56 : vector<8x2xf32>
    %c0_43 = arith.constant 0 : index
    %c0_44 = arith.constant 0 : index
    %58 = vector.load %arg17[%c0_43, %c0_44] : memref<8x2xf32, #tpu.memory_space<vmem>>, vector<8x2xf32>
    tpu.vector_store %arg17[%c0_43, %c0_44], %57 {strides = array<i32>} : memref<8x2xf32, #tpu.memory_space<vmem>>, vector<8x2xf32>,
    return
  }
  func.func @transform_0(%arg0: i32) -> (i32, i32) {
    %c0_i32 = arith.constant 0 : i32
    %c0_i32_0 = arith.constant 0 : i32
    return %arg0, %c0_i32 : i32, i32
  }
  func.func @transform_1(%arg0: i32) -> (i32, i32) {
    %c0_i32 = arith.constant 0 : i32
    %c0_i32_0 = arith.constant 0 : i32
    return %arg0, %c0_i32 : i32, i32
  }
  func.func @transform_2(%arg0: i32) -> (i32, i32) {
    %c0_i32 = arith.constant 0 : i32
    %c0_i32_0 = arith.constant 0 : i32
    %c0_i32_1 = arith.constant 0 : i32
    return %c0_i32, %c0_i32_0 : i32, i32
  }
  func.func @transform_3(%arg0: i32) -> (i32, i32) {
    %c0_i32 = arith.constant 0 : i32
    %c0_i32_0 = arith.constant 0 : i32
    %c0_i32_1 = arith.constant 0 : i32
    return %c0_i32, %c0_i32_0 : i32, i32
  }
  func.func @transform_4(%arg0: i32) -> (i32, i32) {
    %c0_i32 = arith.constant 0 : i32
    %c0_i32_0 = arith.constant 0 : i32
    %c0_i32_1 = arith.constant 0 : i32
    return %c0_i32, %c0_i32_0 : i32, i32
  }
  func.func @transform_5(%arg0: i32) -> (i32, i32) {
    %c0_i32 = arith.constant 0 : i32
    %c0_i32_0 = arith.constant 0 : i32
    %c0_i32_1 = arith.constant 0 : i32
    return %c0_i32, %c0_i32_0 : i32, i32
  }
  func.func @transform_6(%arg0: i32) -> (i32, i32) {
    %c0_i32 = arith.constant 0 : i32
    %c0_i32_0 = arith.constant 0 : i32
    %c0_i32_1 = arith.constant 0 : i32
    return %c0_i32, %c0_i32_0 : i32, i32
  }
  func.func @transform_7(%arg0: i32) -> (i32, i32) {
    %c0_i32 = arith.constant 0 : i32
    %c0_i32_0 = arith.constant 0 : i32
    %c0_i32_1 = arith.constant 0 : i32
    return %c0_i32, %c0_i32_0 : i32, i32
  }
  func.func @transform_8(%arg0: i32) -> (i32, i32) {
    %c0_i32 = arith.constant 0 : i32
    %c0_i32_0 = arith.constant 0 : i32
    %c0_i32_1 = arith.constant 0 : i32
    return %c0_i32, %c0_i32_0 : i32, i32
  }
  func.func @transform_9(%arg0: i32) -> (i32, i32) {
    %c0_i32 = arith.constant 0 : i32
    %c0_i32_0 = arith.constant 0 : i32
    %c0_i32_1 = arith.constant 0 : i32
    return %c0_i32, %c0_i32_0 : i32, i32
  }
  func.func @transform_10(%arg0: i32) -> (i32, i32) {
    %c0_i32 = arith.constant 0 : i32
    %c0_i32_0 = arith.constant 0 : i32
    %c0_i32_1 = arith.constant 0 : i32
    return %c0_i32, %c0_i32_0 : i32, i32
  }
  func.func @transform_11(%arg0: i32) -> (i32, i32) {
    %c0_i32 = arith.constant 0 : i32
    %c0_i32_0 = arith.constant 0 : i32
    %c0_i32_1 = arith.constant 0 : i32
    return %c0_i32, %c0_i32_0 : i32, i32
  }
  func.func @transform_12(%arg0: i32) -> (i32, i32) {
    %c0_i32 = arith.constant 0 : i32
    %c0_i32_0 = arith.constant 0 : i32
    %c0_i32_1 = arith.constant 0 : i32
    return %c0_i32, %c0_i32_0 : i32, i32
  }
  func.func @transform_13(%arg0: i32) -> (i32, i32) {
    %c0_i32 = arith.constant 0 : i32
    %c0_i32_0 = arith.constant 0 : i32
    %c0_i32_1 = arith.constant 0 : i32
    return %c0_i32, %c0_i32_0 : i32, i32
  }
  func.func @transform_14(%arg0: i32) -> (i32, i32) {
    %c0_i32 = arith.constant 0 : i32
    %c0_i32_0 = arith.constant 0 : i32
    %c0_i32_1 = arith.constant 0 : i32
    return %c0_i32, %c0_i32_0 : i32, i32
  }
  func.func @transform_15(%arg0: i32) -> (i32, i32) {
    %c0_i32 = arith.constant 0 : i32
    %c0_i32_0 = arith.constant 0 : i32
    %c0_i32_1 = arith.constant 0 : i32
    return %c0_i32, %c0_i32_0 : i32, i32
  }
  func.func @transform_16(%arg0: i32) -> (i32, i32) {
    %c0_i32 = arith.constant 0 : i32
    %c0_i32_0 = arith.constant 0 : i32
    return %arg0, %c0_i32 : i32, i32
  }
}

</mosaic_0001>

<llo_original>
// kernel: qnetwork_forward.1
$region0: #{qnetwork_forward.1}
  #allocation0 [shape = 'u32[]', space=smem, size = 0x4, offset = 0x4, fixed_abs, tag = 'smem constant byte address 0x4 - core index']
  #allocation1 [shape = 'u32[144,128]{1,0:T(1,128)}', space=vmem, size = 0x12000, scoped, tag = 'internal scratch']
  %s0 = inlined_call_operand.hbm [shape: f32[8,16], index: 0, kind: input, shape index: {}]
  %s1 = inlined_call_operand.hbm [shape: f32[8,8], index: 1, kind: input, shape index: {}]
  %s2 = inlined_call_operand.hbm [shape: bf16[16,512], index: 2, kind: input, shape index: {}]
  %s3 = inlined_call_operand.vmem [shape: bf16[8,512], index: 3, kind: input, shape index: {}]
  %s4 = inlined_call_operand.vmem [shape: f32[1,512], index: 4, kind: input, shape index: {}]
  %s5 = inlined_call_operand.vmem [shape: bf16[256,256], index: 5, kind: input, shape index: {}]
  %s6 = inlined_call_operand.vmem [shape: f32[1,256], index: 6, kind: input, shape index: {}]
  %s7 = inlined_call_operand.hbm [shape: bf16[256,256], index: 7, kind: input, shape index: {}]
  %s8 = inlined_call_operand.vmem [shape: f32[1,256], index: 8, kind: input, shape index: {}]
  %s9 = inlined_call_operand.hbm [shape: bf16[256,256], index: 9, kind: input, shape index: {}]
  %s10 = inlined_call_operand.vmem [shape: f32[1,256], index: 10, kind: input, shape index: {}]
  %s11 = inlined_call_operand.hbm [shape: bf16[256,256], index: 11, kind: input, shape index: {}]
  %s12 = inlined_call_operand.vmem [shape: f32[1,256], index: 12, kind: input, shape index: {}]
  %s13 = inlined_call_operand.vmem [shape: bf16[256,2], index: 13, kind: input, shape index: {}]
  %s14 = inlined_call_operand.vmem [shape: bf16[256,2], index: 14, kind: input, shape index: {}]
  %s15 = inlined_call_operand.vmem [shape: f32[1,2], index: 15, kind: input, shape index: {}]
  %s16 = inlined_call_operand.vmem [shape: f32[8,2], index: 16, kind: output, shape index: {}]
  %s17 = sld [smem:[#allocation0]]
  $region98: #{qnetwork_forward.1} parent=0
    _
  %s19 = ssub.s32 1, %s17
  %s20 = scalar_select 0, %s19, %s17
  $region1: #{qnetwork_forward.1} parent=0
    #allocation2 [shape = 'u8[4096]{0}', space=vmem, size = 0x1000, scoped, tag = 'input window, operand 0, single buffered']
    #allocation3 [shape = 's32[1]{0}', space=sflag, size = 0x4, scoped, tag = 'scoped memory for qnetwork_forward.1']
    #allocation4 [shape = 'u8[4096]{0}', space=vmem, size = 0x1000, scoped, tag = 'input window, operand 1, single buffered']
    #allocation5 [shape = 's32[1]{0}', space=sflag, size = 0x4, scoped, tag = 'scoped memory for qnetwork_forward.1']
    #allocation6 [shape = 'u8[16384]{0}', space=vmem, size = 0x4000, scoped, tag = 'input window, operand 2, single buffered']
    #allocation7 [shape = 'u8[131072]{0}', space=vmem, size = 0x20000, scoped, tag = 'input window, operand 7, single buffered']
    #allocation8 [shape = 's32[1]{0}', space=sflag, size = 0x4, scoped, tag = 'scoped memory for qnetwork_forward.1']
    #allocation9 [shape = 'u8[131072]{0}', space=vmem, size = 0x20000, scoped, tag = 'input window, operand 9, single buffered']
    #allocation10 [shape = 'u8[131072]{0}', space=vmem, size = 0x20000, scoped, tag = 'input window, operand 11, single buffered']
    #allocation11 [shape = 's32[1]{0}', space=sflag, size = 0x4, scoped, tag = 'scoped memory for qnetwork_forward.1']
    %21 = vsyncpa [#allocation3], 0
    %22 = vsyncpa [#allocation5], 0
    %23 = vsyncpa [#allocation8], 0
    %24 = vsyncpa [#allocation11], 0
    // Predicated region
    $region2: #{qnetwork_forward.1} parent=1 // pred_check
      _
    $region3: #{qnetwork_forward.1} parent=1 // pred_check_branch
      %26 = sbr.rel (0) target = $region5
    $region4: #{qnetwork_forward.1} parent=1 // pred_region
      %s28 = ssub.s32 128, 128
      %29 = vsyncadd [#allocation3], %s28
      %s31 = sshll.u32 [#allocation2], 4
      %s32 = int_to_ptr.vmem [resolvable:$true] %s31
      %34 = dma.hbm_to_vmem [thread:$0]  %s0, 128, %s32, [#allocation3]
    $region5: #{qnetwork_forward.1} parent=1 // pred_fallthru
      _
    // Predicated region
    $region6: #{qnetwork_forward.1} parent=1 // pred_check
      _
    $region7: #{qnetwork_forward.1} parent=1 // pred_check_branch
      %36 = sbr.rel (0) target = $region9
    $region8: #{qnetwork_forward.1} parent=1 // pred_region
      %s38 = ssub.s32 128, 128
      %39 = vsyncadd [#allocation5], %s38
      %s41 = sshll.u32 [#allocation4], 4
      %s42 = int_to_ptr.vmem [resolvable:$true] %s41
      %44 = dma.hbm_to_vmem [thread:$0]  %s1, 128, %s42, [#allocation5]
    $region9: #{qnetwork_forward.1} parent=1 // pred_fallthru
      _
    // Predicated region
    $region10: #{qnetwork_forward.1} parent=1 // pred_check
      _
    $region11: #{qnetwork_forward.1} parent=1 // pred_check_branch
      %46 = sbr.rel (0) target = $region13
    $region12: #{qnetwork_forward.1} parent=1 // pred_region
      %s48 = ssub.s32 512, 512
      %49 = vsyncadd [#allocation5], %s48
      %s50 = sshll.u32 [#allocation6], 4
      %s51 = int_to_ptr.vmem [resolvable:$true] %s50
      %56 = dma.hbm_to_vmem [thread:$0]  %s2, 512, %s51, [#allocation5], 256, 256, 16
    $region13: #{qnetwork_forward.1} parent=1 // pred_fallthru
      _
    // Predicated region
    $region14: #{qnetwork_forward.1} parent=1 // pred_check
      _
    $region15: #{qnetwork_forward.1} parent=1 // pred_check_branch
      %58 = sbr.rel (0) target = $region17
    $region16: #{qnetwork_forward.1} parent=1 // pred_region
      _
    $region17: #{qnetwork_forward.1} parent=1 // pred_fallthru
      _
    // Predicated region
    $region18: #{qnetwork_forward.1} parent=1 // pred_check
      _
    $region19: #{qnetwork_forward.1} parent=1 // pred_check_branch
      %60 = sbr.rel (0) target = $region21
    $region20: #{qnetwork_forward.1} parent=1 // pred_region
      _
    $region21: #{qnetwork_forward.1} parent=1 // pred_fallthru
      _
    // Predicated region
    $region22: #{qnetwork_forward.1} parent=1 // pred_check
      _
    $region23: #{qnetwork_forward.1} parent=1 // pred_check_branch
      %62 = sbr.rel (0) target = $region25
    $region24: #{qnetwork_forward.1} parent=1 // pred_region
      _
    $region25: #{qnetwork_forward.1} parent=1 // pred_fallthru
      _
    // Predicated region
    $region26: #{qnetwork_forward.1} parent=1 // pred_check
      _
    $region27: #{qnetwork_forward.1} parent=1 // pred_check_branch
      %64 = sbr.rel (0) target = $region29
    $region28: #{qnetwork_forward.1} parent=1 // pred_region
      _
    $region29: #{qnetwork_forward.1} parent=1 // pred_fallthru
      _
    // Predicated region
    $region30: #{qnetwork_forward.1} parent=1 // pred_check
      _
    $region31: #{qnetwork_forward.1} parent=1 // pred_check_branch
      %66 = sbr.rel (0) target = $region33
    $region32: #{qnetwork_forward.1} parent=1 // pred_region
      %s68 = ssub.s32 4096, 4096
      %69 = vsyncadd [#allocation8], %s68
      %s70 = sshll.u32 [#allocation7], 4
      %s71 = int_to_ptr.vmem [resolvable:$true] %s70
      %76 = dma.hbm_to_vmem [thread:$0]  %s7, 4096, %s71, [#allocation8], 128, 128, 8
    $region33: #{qnetwork_forward.1} parent=1 // pred_fallthru
      _
    // Predicated region
    $region34: #{qnetwork_forward.1} parent=1 // pred_check
      _
    $region35: #{qnetwork_forward.1} parent=1 // pred_check_branch
      %78 = sbr.rel (0) target = $region37
    $region36: #{qnetwork_forward.1} parent=1 // pred_region
      _
    $region37: #{qnetwork_forward.1} parent=1 // pred_fallthru
      _
    // Predicated region
    $region38: #{qnetwork_forward.1} parent=1 // pred_check
      _
    $region39: #{qnetwork_forward.1} parent=1 // pred_check_branch
      %80 = sbr.rel (0) target = $region41
    $region40: #{qnetwork_forward.1} parent=1 // pred_region
      %s82 = ssub.s32 4096, 4096
      %83 = vsyncadd [#allocation8], %s82
      %s84 = sshll.u32 [#allocation9], 4
      %s85 = int_to_ptr.vmem [resolvable:$true] %s84
      %90 = dma.hbm_to_vmem [thread:$0]  %s9, 4096, %s85, [#allocation8], 128, 128, 8
    $region41: #{qnetwork_forward.1} parent=1 // pred_fallthru
      _
    // Predicated region
    $region42: #{qnetwork_forward.1} parent=1 // pred_check
      _
    $region43: #{qnetwork_forward.1} parent=1 // pred_check_branch
      %92 = sbr.rel (0) target = $region45
    $region44: #{qnetwork_forward.1} parent=1 // pred_region
      _
    $region45: #{qnetwork_forward.1} parent=1 // pred_fallthru
      _
    // Predicated region
    $region46: #{qnetwork_forward.1} parent=1 // pred_check
      _
    $region47: #{qnetwork_forward.1} parent=1 // pred_check_branch
      %94 = sbr.rel (0) target = $region49
    $region48: #{qnetwork_forward.1} parent=1 // pred_region
      %s96 = ssub.s32 4096, 4096
      %97 = vsyncadd [#allocation11], %s96
      %s98 = sshll.u32 [#allocation10], 4
      %s99 = int_to_ptr.vmem [resolvable:$true] %s98
      %104 = dma.hbm_to_vmem [thread:$0]  %s11, 4096, %s99, [#allocation11], 128, 128, 8
    $region49: #{qnetwork_forward.1} parent=1 // pred_fallthru
      _
    // Predicated region
    $region50: #{qnetwork_forward.1} parent=1 // pred_check
      _
    $region51: #{qnetwork_forward.1} parent=1 // pred_check_branch
      %106 = sbr.rel (0) target = $region53
    $region52: #{qnetwork_forward.1} parent=1 // pred_region
      _
    $region53: #{qnetwork_forward.1} parent=1 // pred_fallthru
      _
    // Predicated region
    $region54: #{qnetwork_forward.1} parent=1 // pred_check
      _
    $region55: #{qnetwork_forward.1} parent=1 // pred_check_branch
      %108 = sbr.rel (0) target = $region57
    $region56: #{qnetwork_forward.1} parent=1 // pred_region
      _
    $region57: #{qnetwork_forward.1} parent=1 // pred_fallthru
      _
    // Predicated region
    $region58: #{qnetwork_forward.1} parent=1 // pred_check
      _
    $region59: #{qnetwork_forward.1} parent=1 // pred_check_branch
      %110 = sbr.rel (0) target = $region61
    $region60: #{qnetwork_forward.1} parent=1 // pred_region
      _
    $region61: #{qnetwork_forward.1} parent=1 // pred_fallthru
      _
    // Predicated region
    $region62: #{qnetwork_forward.1} parent=1 // pred_check
      _
    $region63: #{qnetwork_forward.1} parent=1 // pred_check_branch
      %112 = sbr.rel (0) target = $region65
    $region64: #{qnetwork_forward.1} parent=1 // pred_region
      _
    $region65: #{qnetwork_forward.1} parent=1 // pred_fallthru
      _
    // Predicated region
    $region66: #{qnetwork_forward.1} parent=1 // pred_check
      _
    $region67: #{qnetwork_forward.1} parent=1 // pred_check_branch
      %114 = sbr.rel (0) target = $region69
    $region68: #{qnetwork_forward.1} parent=1 // pred_region
      %115 = dma.done [#allocation3], 128
    $region69: #{qnetwork_forward.1} parent=1 // pred_fallthru
      _
    // Predicated region
    $region70: #{qnetwork_forward.1} parent=1 // pred_check
      _
    $region71: #{qnetwork_forward.1} parent=1 // pred_check_branch
      %117 = sbr.rel (0) target = $region73
    $region72: #{qnetwork_forward.1} parent=1 // pred_region
      %118 = dma.done [#allocation5], 128
    $region73: #{qnetwork_forward.1} parent=1 // pred_fallthru
      _
    // Predicated region
    $region74: #{qnetwork_forward.1} parent=1 // pred_check
      _
    $region75: #{qnetwork_forward.1} parent=1 // pred_check_branch
      %120 = sbr.rel (0) target = $region77
    $region76: #{qnetwork_forward.1} parent=1 // pred_region
      %121 = dma.done [#allocation5], 512
    $region77: #{qnetwork_forward.1} parent=1 // pred_fallthru
      _
    // Predicated region
    $region78: #{qnetwork_forward.1} parent=1 // pred_check
      _
    $region79: #{qnetwork_forward.1} parent=1 // pred_check_branch
      %123 = sbr.rel (0) target = $region81
    $region80: #{qnetwork_forward.1} parent=1 // pred_region
      %124 = dma.done [#allocation8], 4096
    $region81: #{qnetwork_forward.1} parent=1 // pred_fallthru
      _
    // Predicated region
    $region82: #{qnetwork_forward.1} parent=1 // pred_check
      _
    $region83: #{qnetwork_forward.1} parent=1 // pred_check_branch
      %126 = sbr.rel (0) target = $region85
    $region84: #{qnetwork_forward.1} parent=1 // pred_region
      %127 = dma.done [#allocation8], 4096
    $region85: #{qnetwork_forward.1} parent=1 // pred_fallthru
      _
    // Predicated region
    $region86: #{qnetwork_forward.1} parent=1 // pred_check
      _
    $region87: #{qnetwork_forward.1} parent=1 // pred_check_branch
      %129 = sbr.rel (0) target = $region89
    $region88: #{qnetwork_forward.1} parent=1 // pred_region
      %130 = dma.done [#allocation11], 4096
    $region89: #{qnetwork_forward.1} parent=1 // pred_fallthru
      _
    %v132 = vld [vmem:[#allocation2] sm:$0xff]
    %v133 = vpack.c.bf16 %v132, %v132
    %v134 = vld [vmem:[#allocation4] sm:$0xff]
    %v135 = vpack.c.bf16 %v134, %v134
    %v136 = vld [vmem:[#allocation6] sm:$0xff]
    %v137 = vld [vmem:[#allocation6 + $0x8] sm:$0xff]
    %v138 = vld [vmem:[#allocation6 + $0x10] sm:$0xff]
    %v139 = vld [vmem:[#allocation6 + $0x18] sm:$0xff]
    %v140 = vld [vmem:[%s3] sm:$0xff]
    %v141 = vld [vmem:[%s3 + $0x8] sm:$0xff]
    %v144 = vunpack.c.l.b16 %v140
    %v145 = vunpack.c.h.b16 %v140
    %v146 = vunpack.c.l.b16 %v141
    %v147 = vunpack.c.h.b16 %v141
    %v148 = vpack.c.b16 %v144, %v144
    %v149 = vpack.c.b16 %v145, %v145
    %v150 = vpack.c.b16 %v146, %v146
    %v151 = vpack.c.b16 %v147, %v147
    %vm152 = vcmask 64512
    %v154 = vsel %vm152, %v135, 0
    %vm156 = vcmask 1043456
    %v158 = vsel %vm156, %v148, 0
    %v161 = vsel %vm156, %v149, 0
    %v164 = vsel %vm156, %v150, 0
    %v167 = vsel %vm156, %v151, 0
    %169 = vmatprep.subr.bf16.mxu0 %v161
    %170 = vmatpush1.bf16.msra.mxu0 %v158
    %171 = vmatprep.subr.bf16.mxu0 0
    %172 = vmatpush1.bf16.msra.mxu0 0
    %173 = vmatprep.subr.bf16.mxu0 0
    %174 = vmatpush1.bf16.msra.mxu0 0
    %175 = vmatprep.subr.bf16.mxu0 0
    %176 = vmatpush1.bf16.msra.mxu0 0
    %177 = vmatprep.subr.bf16.mxu0 0
    %178 = vmatpush1.bf16.msra.mxu0 0
    %179 = vmatprep.subr.bf16.mxu0 0
    %180 = vmatpush1.bf16.msra.mxu0 0
    %181 = vmatprep.subr.bf16.mxu0 0
    %182 = vmatpush1.bf16.msra.mxu0 0
    %183 = vmatprep.subr.bf16.mxu0 0
    %184 = vmatpush1.bf16.msra.mxu0 0
    %185 = vmatprep.subr.bf16.mxu0 0
    %186 = vmatpush1.bf16.msra.mxu0 0
    %187 = vmatprep.subr.bf16.mxu0 0
    %188 = vmatpush1.bf16.msra.mxu0 0
    %189 = vmatprep.subr.bf16.mxu0 0
    %190 = vmatpush1.bf16.msra.mxu0 0
    %191 = vmatprep.subr.bf16.mxu0 0
    %192 = vmatpush1.bf16.msra.mxu0 0
    %193 = vmatprep.subr.bf16.mxu0 0
    %194 = vmatpush1.bf16.msra.mxu0 0
    %195 = vmatprep.subr.bf16.mxu0 0
    %196 = vmatpush1.bf16.msra.mxu0 0
    %197 = vmatprep.subr.bf16.mxu0 0
    %198 = vmatpush1.bf16.msra.mxu0 0
    %199 = vmatprep.subr.bf16.mxu0 0
    %200 = vmatpush1.bf16.msra.mxu0 0
    %201 = vmatprep.mubr.bf16.mxu0 0
    %202 = vmatmul.mubr.bf16.gmra.mrb[0].mxu0 %v154
    %v203 = vpop.f32.mrb[0].mxu0
    %v204 = vadd.f32 0.0, %v203
    %v205 = vpop.f32.mrb[0].mxu0
    %v206 = vadd.f32 0.0, %v205
    %v207 = vpop.f32.mrb[0].mxu0
    %v208 = vpop.f32.mrb[0].mxu0
    %209 = vdwg.mxu0
    %210 = vmatprep.subr.bf16.mxu0 %v167
    %211 = vmatpush1.bf16.msra.mxu0 %v164
    %212 = vmatprep.subr.bf16.mxu0 0
    %213 = vmatpush1.bf16.msra.mxu0 0
    %214 = vmatprep.subr.bf16.mxu0 0
    %215 = vmatpush1.bf16.msra.mxu0 0
    %216 = vmatprep.subr.bf16.mxu0 0
    %217 = vmatpush1.bf16.msra.mxu0 0
    %218 = vmatprep.subr.bf16.mxu0 0
    %219 = vmatpush1.bf16.msra.mxu0 0
    %220 = vmatprep.subr.bf16.mxu0 0
    %221 = vmatpush1.bf16.msra.mxu0 0
    %222 = vmatprep.subr.bf16.mxu0 0
    %223 = vmatpush1.bf16.msra.mxu0 0
    %224 = vmatprep.subr.bf16.mxu0 0
    %225 = vmatpush1.bf16.msra.mxu0 0
    %226 = vmatprep.subr.bf16.mxu0 0
    %227 = vmatpush1.bf16.msra.mxu0 0
    %228 = vmatprep.subr.bf16.mxu0 0
    %229 = vmatpush1.bf16.msra.mxu0 0
    %230 = vmatprep.subr.bf16.mxu0 0
    %231 = vmatpush1.bf16.msra.mxu0 0
    %232 = vmatprep.subr.bf16.mxu0 0
    %233 = vmatpush1.bf16.msra.mxu0 0
    %234 = vmatprep.subr.bf16.mxu0 0
    %235 = vmatpush1.bf16.msra.mxu0 0
    %236 = vmatprep.subr.bf16.mxu0 0
    %237 = vmatpush1.bf16.msra.mxu0 0
    %238 = vmatprep.subr.bf16.mxu0 0
    %239 = vmatpush1.bf16.msra.mxu0 0
    %240 = vmatprep.subr.bf16.mxu0 0
    %241 = vmatpush1.bf16.msra.mxu0 0
    %242 = vmatprep.mubr.bf16.mxu0 0
    %243 = vmatmul.mubr.bf16.gmra.mrb[0].mxu0 %v154
    %v244 = vpop.f32.mrb[0].mxu0
    %v245 = vadd.f32 0.0, %v244
    %v246 = vpop.f32.mrb[0].mxu0
    %v247 = vadd.f32 0.0, %v246
    %v248 = vpop.f32.mrb[0].mxu0
    %v249 = vpop.f32.mrb[0].mxu0
    %250 = vdwg.mxu0
    %v255 = vunpack.c.l.b16 %v136
    %v256 = vunpack.c.h.b16 %v136
    %v257 = vunpack.c.l.b16 %v137
    %v258 = vunpack.c.h.b16 %v137
    %v259 = vunpack.c.l.b16 %v138
    %v260 = vunpack.c.h.b16 %v138
    %v261 = vunpack.c.l.b16 %v139
    %v262 = vunpack.c.h.b16 %v139
    %v263 = vpack.c.b16 %v259, %v255
    %v264 = vpack.c.b16 %v260, %v256
    %v265 = vpack.c.b16 %v261, %v257
    %v266 = vpack.c.b16 %v262, %v258
    %vm271 = vcmask 130048
    %v273 = vsel %vm271, %v133, 0
    %275 = vmatprep.subr.bf16.mxu0 %v264
    %276 = vmatpush1.bf16.msra.mxu0 %v263
    %277 = vmatprep.subr.bf16.mxu0 0
    %278 = vmatpush1.bf16.msra.mxu0 0
    %279 = vmatprep.subr.bf16.mxu0 0
    %280 = vmatpush1.bf16.msra.mxu0 0
    %281 = vmatprep.subr.bf16.mxu0 0
    %282 = vmatpush1.bf16.msra.mxu0 0
    %283 = vmatprep.subr.bf16.mxu0 0
    %284 = vmatpush1.bf16.msra.mxu0 0
    %285 = vmatprep.subr.bf16.mxu0 0
    %286 = vmatpush1.bf16.msra.mxu0 0
    %287 = vmatprep.subr.bf16.mxu0 0
    %288 = vmatpush1.bf16.msra.mxu0 0
    %289 = vmatprep.subr.bf16.mxu0 0
    %290 = vmatpush1.bf16.msra.mxu0 0
    %291 = vmatprep.subr.bf16.mxu0 0
    %292 = vmatpush1.bf16.msra.mxu0 0
    %293 = vmatprep.subr.bf16.mxu0 0
    %294 = vmatpush1.bf16.msra.mxu0 0
    %295 = vmatprep.subr.bf16.mxu0 0
    %296 = vmatpush1.bf16.msra.mxu0 0
    %297 = vmatprep.subr.bf16.mxu0 0
    %298 = vmatpush1.bf16.msra.mxu0 0
    %299 = vmatprep.subr.bf16.mxu0 0
    %300 = vmatpush1.bf16.msra.mxu0 0
    %301 = vmatprep.subr.bf16.mxu0 0
    %302 = vmatpush1.bf16.msra.mxu0 0
    %303 = vmatprep.subr.bf16.mxu0 0
    %304 = vmatpush1.bf16.msra.mxu0 0
    %305 = vmatprep.subr.bf16.mxu0 0
    %306 = vmatpush1.bf16.msra.mxu0 0
    %307 = vmatprep.mubr.bf16.mxu0 0
    %308 = vmatmul.mubr.bf16.gmra.mrb[0].mxu0 %v273
    %v309 = vpop.f32.mrb[0].mxu0
    %v310 = vadd.f32 %v204, %v309
    %v311 = vpop.f32.mrb[0].mxu0
    %v312 = vadd.f32 %v206, %v311
    %v313 = vpop.f32.mrb[0].mxu0
    %v314 = vpop.f32.mrb[0].mxu0
    %315 = vdwg.mxu0
    %316 = vmatprep.subr.bf16.mxu0 %v266
    %317 = vmatpush1.bf16.msra.mxu0 %v265
    %318 = vmatprep.subr.bf16.mxu0 0
    %319 = vmatpush1.bf16.msra.mxu0 0
    %320 = vmatprep.subr.bf16.mxu0 0
    %321 = vmatpush1.bf16.msra.mxu0 0
    %322 = vmatprep.subr.bf16.mxu0 0
    %323 = vmatpush1.bf16.msra.mxu0 0
    %324 = vmatprep.subr.bf16.mxu0 0
    %325 = vmatpush1.bf16.msra.mxu0 0
    %326 = vmatprep.subr.bf16.mxu0 0
    %327 = vmatpush1.bf16.msra.mxu0 0
    %328 = vmatprep.subr.bf16.mxu0 0
    %329 = vmatpush1.bf16.msra.mxu0 0
    %330 = vmatprep.subr.bf16.mxu0 0
    %331 = vmatpush1.bf16.msra.mxu0 0
    %332 = vmatprep.subr.bf16.mxu0 0
    %333 = vmatpush1.bf16.msra.mxu0 0
    %334 = vmatprep.subr.bf16.mxu0 0
    %335 = vmatpush1.bf16.msra.mxu0 0
    %336 = vmatprep.subr.bf16.mxu0 0
    %337 = vmatpush1.bf16.msra.mxu0 0
    %338 = vmatprep.subr.bf16.mxu0 0
    %339 = vmatpush1.bf16.msra.mxu0 0
    %340 = vmatprep.subr.bf16.mxu0 0
    %341 = vmatpush1.bf16.msra.mxu0 0
    %342 = vmatprep.subr.bf16.mxu0 0
    %343 = vmatpush1.bf16.msra.mxu0 0
    %344 = vmatprep.subr.bf16.mxu0 0
    %345 = vmatpush1.bf16.msra.mxu0 0
    %346 = vmatprep.subr.bf16.mxu0 0
    %347 = vmatpush1.bf16.msra.mxu0 0
    %348 = vmatprep.mubr.bf16.mxu0 0
    %349 = vmatmul.mubr.bf16.gmra.mrb[0].mxu0 %v273
    %v350 = vpop.f32.mrb[0].mxu0
    %v351 = vadd.f32 %v245, %v350
    %v352 = vpop.f32.mrb[0].mxu0
    %v353 = vadd.f32 %v247, %v352
    %v354 = vpop.f32.mrb[0].mxu0
    %v355 = vpop.f32.mrb[0].mxu0
    %356 = vdwg.mxu0
    %v357 = vld [vmem:[%s4] sm:$0xf]
    %v359 = vlaneseq
    %v360 = vshrl.u32 %v359, 7
    %v361 = vsub.s32 0, %v360
    %v362 = vrot.slane %v357, %v361
    %v363 = vlaneseq
    %v364 = vshrl.u32 %v363, 7
    %v365 = vsub.s32 1, %v364
    %v366 = vrot.slane %v357, %v365
    %v367 = vlaneseq
    %v368 = vshrl.u32 %v367, 7
    %v369 = vsub.s32 2, %v368
    %v370 = vrot.slane %v357, %v369
    %v371 = vlaneseq
    %v372 = vshrl.u32 %v371, 7
    %v373 = vsub.s32 3, %v372
    %v374 = vrot.slane %v357, %v373
    %v379 = vadd.f32 %v310, %v362
    %v380 = vadd.f32 %v312, %v366
    %v381 = vadd.f32 %v351, %v370
    %v382 = vadd.f32 %v353, %v374
    %v383 = vmax.f32 %v379, 0.0
    %v384 = vmax.f32 %v380, 0.0
    %v385 = vmax.f32 %v381, 0.0
    %v386 = vmax.f32 %v382, 0.0
    %v387 = vpack.c.bf16 %v383, %v383
    %v388 = vpack.c.bf16 %v384, %v384
    %v389 = vpack.c.bf16 %v385, %v385
    %v390 = vpack.c.bf16 %v386, %v386
    %v391 = vld [vmem:[%s5] sm:$0xff]
    %v392 = vld [vmem:[%s5 + $0x8] sm:$0xff]
    %v393 = vld [vmem:[%s5 + $0x10] sm:$0xff]
    %v394 = vld [vmem:[%s5 + $0x18] sm:$0xff]
    %v395 = vld [vmem:[%s5 + $0x20] sm:$0xff]
    %v396 = vld [vmem:[%s5 + $0x28] sm:$0xff]
    %v397 = vld [vmem:[%s5 + $0x30] sm:$0xff]
    %v398 = vld [vmem:[%s5 + $0x38] sm:$0xff]
    %v399 = vld [vmem:[%s5 + $0x40] sm:$0xff]
    %v400 = vld [vmem:[%s5 + $0x48] sm:$0xff]
    %v401 = vld [vmem:[%s5 + $0x50] sm:$0xff]
    %v402 = vld [vmem:[%s5 + $0x58] sm:$0xff]
    %v403 = vld [vmem:[%s5 + $0x60] sm:$0xff]
    %v404 = vld [vmem:[%s5 + $0x68] sm:$0xff]
    %v405 = vld [vmem:[%s5 + $0x70] sm:$0xff]
    %v406 = vld [vmem:[%s5 + $0x78] sm:$0xff]
    %v407 = vld [vmem:[%s5 + $0x80] sm:$0xff]
    %v408 = vld [vmem:[%s5 + $0x88] sm:$0xff]
    %v409 = vld [vmem:[%s5 + $0x90] sm:$0xff]
    %v410 = vld [vmem:[%s5 + $0x98] sm:$0xff]
    %v411 = vld [vmem:[%s5 + $0xa0] sm:$0xff]
    %v412 = vld [vmem:[%s5 + $0xa8] sm:$0xff]
    %v413 = vld [vmem:[%s5 + $0xb0] sm:$0xff]
    %v414 = vld [vmem:[%s5 + $0xb8] sm:$0xff]
    %v415 = vld [vmem:[%s5 + $0xc0] sm:$0xff]
    %v416 = vld [vmem:[%s5 + $0xc8] sm:$0xff]
    %v417 = vld [vmem:[%s5 + $0xd0] sm:$0xff]
    %v418 = vld [vmem:[%s5 + $0xd8] sm:$0xff]
    %v419 = vld [vmem:[%s5 + $0xe0] sm:$0xff]
    %v420 = vld [vmem:[%s5 + $0xe8] sm:$0xff]
    %v421 = vld [vmem:[%s5 + $0xf0] sm:$0xff]
    %v422 = vld [vmem:[%s5 + $0xf8] sm:$0xff]
    %v423 = vld [vmem:[%s6] sm:$0x3]
    %v425 = vlaneseq
    %v426 = vshrl.u32 %v425, 7
    %v427 = vsub.s32 0, %v426
    %v428 = vrot.slane %v423, %v427
    %v429 = vlaneseq
    %v430 = vshrl.u32 %v429, 7
    %v431 = vsub.s32 1, %v430
    %v432 = vrot.slane %v423, %v431
    %v467 = vunpack.c.l.b16 %v391
    %v468 = vunpack.c.h.b16 %v391
    %v469 = vunpack.c.l.b16 %v392
    %v470 = vunpack.c.h.b16 %v392
    %v471 = vunpack.c.l.b16 %v393
    %v472 = vunpack.c.h.b16 %v393
    %v473 = vunpack.c.l.b16 %v394
    %v474 = vunpack.c.h.b16 %v394
    %v475 = vunpack.c.l.b16 %v395
    %v476 = vunpack.c.h.b16 %v395
    %v477 = vunpack.c.l.b16 %v396
    %v478 = vunpack.c.h.b16 %v396
    %v479 = vunpack.c.l.b16 %v397
    %v480 = vunpack.c.h.b16 %v397
    %v481 = vunpack.c.l.b16 %v398
    %v482 = vunpack.c.h.b16 %v398
    %v483 = vunpack.c.l.b16 %v399
    %v484 = vunpack.c.h.b16 %v399
    %v485 = vunpack.c.l.b16 %v400
    %v486 = vunpack.c.h.b16 %v400
    %v487 = vunpack.c.l.b16 %v401
    %v488 = vunpack.c.h.b16 %v401
    %v489 = vunpack.c.l.b16 %v402
    %v490 = vunpack.c.h.b16 %v402
    %v491 = vunpack.c.l.b16 %v403
    %v492 = vunpack.c.h.b16 %v403
    %v493 = vunpack.c.l.b16 %v404
    %v494 = vunpack.c.h.b16 %v404
    %v495 = vunpack.c.l.b16 %v405
    %v496 = vunpack.c.h.b16 %v405
    %v497 = vunpack.c.l.b16 %v406
    %v498 = vunpack.c.h.b16 %v406
    %v499 = vunpack.c.l.b16 %v407
    %v500 = vunpack.c.h.b16 %v407
    %v501 = vunpack.c.l.b16 %v408
    %v502 = vunpack.c.h.b16 %v408
    %v503 = vunpack.c.l.b16 %v409
    %v504 = vunpack.c.h.b16 %v409
    %v505 = vunpack.c.l.b16 %v410
    %v506 = vunpack.c.h.b16 %v410
    %v507 = vunpack.c.l.b16 %v411
    %v508 = vunpack.c.h.b16 %v411
    %v509 = vunpack.c.l.b16 %v412
    %v510 = vunpack.c.h.b16 %v412
    %v511 = vunpack.c.l.b16 %v413
    %v512 = vunpack.c.h.b16 %v413
    %v513 = vunpack.c.l.b16 %v414
    %v514 = vunpack.c.h.b16 %v414
    %v515 = vunpack.c.l.b16 %v415
    %v516 = vunpack.c.h.b16 %v415
    %v517 = vunpack.c.l.b16 %v416
    %v518 = vunpack.c.h.b16 %v416
    %v519 = vunpack.c.l.b16 %v417
    %v520 = vunpack.c.h.b16 %v417
    %v521 = vunpack.c.l.b16 %v418
    %v522 = vunpack.c.h.b16 %v418
    %v523 = vunpack.c.l.b16 %v419
    %v524 = vunpack.c.h.b16 %v419
    %v525 = vunpack.c.l.b16 %v420
    %v526 = vunpack.c.h.b16 %v420
    %v527 = vunpack.c.l.b16 %v421
    %v528 = vunpack.c.h.b16 %v421
    %v529 = vunpack.c.l.b16 %v422
    %v530 = vunpack.c.h.b16 %v422
    %v531 = vpack.c.b16 %v469, %v467
    %v532 = vpack.c.b16 %v470, %v468
    %v533 = vpack.c.b16 %v473, %v471
    %v534 = vpack.c.b16 %v474, %v472
    %v535 = vpack.c.b16 %v477, %v475
    %v536 = vpack.c.b16 %v478, %v476
    %v537 = vpack.c.b16 %v481, %v479
    %v538 = vpack.c.b16 %v482, %v480
    %v539 = vpack.c.b16 %v485, %v483
    %v540 = vpack.c.b16 %v486, %v484
    %v541 = vpack.c.b16 %v489, %v487
    %v542 = vpack.c.b16 %v490, %v488
    %v543 = vpack.c.b16 %v493, %v491
    %v544 = vpack.c.b16 %v494, %v492
    %v545 = vpack.c.b16 %v497, %v495
    %v546 = vpack.c.b16 %v498, %v496
    %v547 = vpack.c.b16 %v501, %v499
    %v548 = vpack.c.b16 %v502, %v500
    %v549 = vpack.c.b16 %v505, %v503
    %v550 = vpack.c.b16 %v506, %v504
    %v551 = vpack.c.b16 %v509, %v507
    %v552 = vpack.c.b16 %v510, %v508
    %v553 = vpack.c.b16 %v513, %v511
    %v554 = vpack.c.b16 %v514, %v512
    %v555 = vpack.c.b16 %v517, %v515
    %v556 = vpack.c.b16 %v518, %v516
    %v557 = vpack.c.b16 %v521, %v519
    %v558 = vpack.c.b16 %v522, %v520
    %v559 = vpack.c.b16 %v525, %v523
    %v560 = vpack.c.b16 %v526, %v524
    %v561 = vpack.c.b16 %v529, %v527
    %v562 = vpack.c.b16 %v530, %v528
    %595 = vmatprep.subr.bf16.mxu0 %v532
    %596 = vmatpush1.bf16.msra.mxu0 %v531
    %597 = vmatprep.subr.bf16.mxu0 %v534
    %598 = vmatpush1.bf16.msra.mxu0 %v533
    %599 = vmatprep.subr.bf16.mxu0 %v536
    %600 = vmatpush1.bf16.msra.mxu0 %v535
    %601 = vmatprep.subr.bf16.mxu0 %v538
    %602 = vmatpush1.bf16.msra.mxu0 %v537
    %603 = vmatprep.subr.bf16.mxu0 %v540
    %604 = vmatpush1.bf16.msra.mxu0 %v539
    %605 = vmatprep.subr.bf16.mxu0 %v542
    %606 = vmatpush1.bf16.msra.mxu0 %v541
    %607 = vmatprep.subr.bf16.mxu0 %v544
    %608 = vmatpush1.bf16.msra.mxu0 %v543
    %609 = vmatprep.subr.bf16.mxu0 %v546
    %610 = vmatpush1.bf16.msra.mxu0 %v545
    %611 = vmatprep.subr.bf16.mxu0 %v548
    %612 = vmatpush1.bf16.msra.mxu0 %v547
    %613 = vmatprep.subr.bf16.mxu0 %v550
    %614 = vmatpush1.bf16.msra.mxu0 %v549
    %615 = vmatprep.subr.bf16.mxu0 %v552
    %616 = vmatpush1.bf16.msra.mxu0 %v551
    %617 = vmatprep.subr.bf16.mxu0 %v554
    %618 = vmatpush1.bf16.msra.mxu0 %v553
    %619 = vmatprep.subr.bf16.mxu0 %v556
    %620 = vmatpush1.bf16.msra.mxu0 %v555
    %621 = vmatprep.subr.bf16.mxu0 %v558
    %622 = vmatpush1.bf16.msra.mxu0 %v557
    %623 = vmatprep.subr.bf16.mxu0 %v560
    %624 = vmatpush1.bf16.msra.mxu0 %v559
    %625 = vmatprep.subr.bf16.mxu0 %v562
    %626 = vmatpush1.bf16.msra.mxu0 %v561
    %627 = vmatprep.mubr.bf16.mxu0 %v388
    %628 = vmatmul.mubr.bf16.gmra.mrb[0].mxu0 %v387
    %v629 = vpop.f32.mrb[0].mxu0
    %v630 = vadd.f32 %v428, %v629
    %v631 = vpop.f32.mrb[0].mxu0
    %v632 = vadd.f32 %v432, %v631
    %v633 = vpop.f32.mrb[0].mxu0
    %v634 = vpop.f32.mrb[0].mxu0
    %635 = vdwg.mxu0
    %v636 = vmax.f32 %v630, 0.0
    %v637 = vmax.f32 %v632, 0.0
    %v638 = vpack.c.bf16 %v636, %v636
    %v639 = vpack.c.bf16 %v637, %v637
    %v640 = vld [vmem:[#allocation7] sm:$0xff]
    %v641 = vld [vmem:[#allocation7 + $0x8] sm:$0xff]
    %v642 = vld [vmem:[#allocation7 + $0x10] sm:$0xff]
    %v643 = vld [vmem:[#allocation7 + $0x18] sm:$0xff]
    %v644 = vld [vmem:[#allocation7 + $0x20] sm:$0xff]
    %v645 = vld [vmem:[#allocation7 + $0x28] sm:$0xff]
    %v646 = vld [vmem:[#allocation7 + $0x30] sm:$0xff]
    %v647 = vld [vmem:[#allocation7 + $0x38] sm:$0xff]
    %v648 = vld [vmem:[#allocation7 + $0x40] sm:$0xff]
    %v649 = vld [vmem:[#allocation7 + $0x48] sm:$0xff]
    %v650 = vld [vmem:[#allocation7 + $0x50] sm:$0xff]
    %v651 = vld [vmem:[#allocation7 + $0x58] sm:$0xff]
    %v652 = vld [vmem:[#allocation7 + $0x60] sm:$0xff]
    %v653 = vld [vmem:[#allocation7 + $0x68] sm:$0xff]
    %v654 = vld [vmem:[#allocation7 + $0x70] sm:$0xff]
    %v655 = vld [vmem:[#allocation7 + $0x78] sm:$0xff]
    %v656 = vld [vmem:[#allocation7 + $0x80] sm:$0xff]
    %v657 = vld [vmem:[#allocation7 + $0x88] sm:$0xff]
    %v658 = vld [vmem:[#allocation7 + $0x90] sm:$0xff]
    %v659 = vld [vmem:[#allocation7 + $0x98] sm:$0xff]
    %v660 = vld [vmem:[#allocation7 + $0xa0] sm:$0xff]
    %v661 = vld [vmem:[#allocation7 + $0xa8] sm:$0xff]
    %v662 = vld [vmem:[#allocation7 + $0xb0] sm:$0xff]
    %v663 = vld [vmem:[#allocation7 + $0xb8] sm:$0xff]
    %v664 = vld [vmem:[#allocation7 + $0xc0] sm:$0xff]
    %v665 = vld [vmem:[#allocation7 + $0xc8] sm:$0xff]
    %v666 = vld [vmem:[#allocation7 + $0xd0] sm:$0xff]
    %v667 = vld [vmem:[#allocation7 + $0xd8] sm:$0xff]
    %v668 = vld [vmem:[#allocation7 + $0xe0] sm:$0xff]
    %v669 = vld [vmem:[#allocation7 + $0xe8] sm:$0xff]
    %v670 = vld [vmem:[#allocation7 + $0xf0] sm:$0xff]
    %v671 = vld [vmem:[#allocation7 + $0xf8] sm:$0xff]
    %v672 = vld [vmem:[%s8] sm:$0x3]
    %v674 = vlaneseq
    %v675 = vshrl.u32 %v674, 7
    %v676 = vsub.s32 0, %v675
    %v677 = vrot.slane %v672, %v676
    %v678 = vlaneseq
    %v679 = vshrl.u32 %v678, 7
    %v680 = vsub.s32 1, %v679
    %v681 = vrot.slane %v672, %v680
    %v716 = vunpack.c.l.b16 %v640
    %v717 = vunpack.c.h.b16 %v640
    %v718 = vunpack.c.l.b16 %v641
    %v719 = vunpack.c.h.b16 %v641
    %v720 = vunpack.c.l.b16 %v642
    %v721 = vunpack.c.h.b16 %v642
    %v722 = vunpack.c.l.b16 %v643
    %v723 = vunpack.c.h.b16 %v643
    %v724 = vunpack.c.l.b16 %v644
    %v725 = vunpack.c.h.b16 %v644
    %v726 = vunpack.c.l.b16 %v645
    %v727 = vunpack.c.h.b16 %v645
    %v728 = vunpack.c.l.b16 %v646
    %v729 = vunpack.c.h.b16 %v646
    %v730 = vunpack.c.l.b16 %v647
    %v731 = vunpack.c.h.b16 %v647
    %v732 = vunpack.c.l.b16 %v648
    %v733 = vunpack.c.h.b16 %v648
    %v734 = vunpack.c.l.b16 %v649
    %v735 = vunpack.c.h.b16 %v649
    %v736 = vunpack.c.l.b16 %v650
    %v737 = vunpack.c.h.b16 %v650
    %v738 = vunpack.c.l.b16 %v651
    %v739 = vunpack.c.h.b16 %v651
    %v740 = vunpack.c.l.b16 %v652
    %v741 = vunpack.c.h.b16 %v652
    %v742 = vunpack.c.l.b16 %v653
    %v743 = vunpack.c.h.b16 %v653
    %v744 = vunpack.c.l.b16 %v654
    %v745 = vunpack.c.h.b16 %v654
    %v746 = vunpack.c.l.b16 %v655
    %v747 = vunpack.c.h.b16 %v655
    %v748 = vunpack.c.l.b16 %v656
    %v749 = vunpack.c.h.b16 %v656
    %v750 = vunpack.c.l.b16 %v657
    %v751 = vunpack.c.h.b16 %v657
    %v752 = vunpack.c.l.b16 %v658
    %v753 = vunpack.c.h.b16 %v658
    %v754 = vunpack.c.l.b16 %v659
    %v755 = vunpack.c.h.b16 %v659
    %v756 = vunpack.c.l.b16 %v660
    %v757 = vunpack.c.h.b16 %v660
    %v758 = vunpack.c.l.b16 %v661
    %v759 = vunpack.c.h.b16 %v661
    %v760 = vunpack.c.l.b16 %v662
    %v761 = vunpack.c.h.b16 %v662
    %v762 = vunpack.c.l.b16 %v663
    %v763 = vunpack.c.h.b16 %v663
    %v764 = vunpack.c.l.b16 %v664
    %v765 = vunpack.c.h.b16 %v664
    %v766 = vunpack.c.l.b16 %v665
    %v767 = vunpack.c.h.b16 %v665
    %v768 = vunpack.c.l.b16 %v666
    %v769 = vunpack.c.h.b16 %v666
    %v770 = vunpack.c.l.b16 %v667
    %v771 = vunpack.c.h.b16 %v667
    %v772 = vunpack.c.l.b16 %v668
    %v773 = vunpack.c.h.b16 %v668
    %v774 = vunpack.c.l.b16 %v669
    %v775 = vunpack.c.h.b16 %v669
    %v776 = vunpack.c.l.b16 %v670
    %v777 = vunpack.c.h.b16 %v670
    %v778 = vunpack.c.l.b16 %v671
    %v779 = vunpack.c.h.b16 %v671
    %v780 = vpack.c.b16 %v718, %v716
    %v781 = vpack.c.b16 %v719, %v717
    %v782 = vpack.c.b16 %v722, %v720
    %v783 = vpack.c.b16 %v723, %v721
    %v784 = vpack.c.b16 %v726, %v724
    %v785 = vpack.c.b16 %v727, %v725
    %v786 = vpack.c.b16 %v730, %v728
    %v787 = vpack.c.b16 %v731, %v729
    %v788 = vpack.c.b16 %v734, %v732
    %v789 = vpack.c.b16 %v735, %v733
    %v790 = vpack.c.b16 %v738, %v736
    %v791 = vpack.c.b16 %v739, %v737
    %v792 = vpack.c.b16 %v742, %v740
    %v793 = vpack.c.b16 %v743, %v741
    %v794 = vpack.c.b16 %v746, %v744
    %v795 = vpack.c.b16 %v747, %v745
    %v796 = vpack.c.b16 %v750, %v748
    %v797 = vpack.c.b16 %v751, %v749
    %v798 = vpack.c.b16 %v754, %v752
    %v799 = vpack.c.b16 %v755, %v753
    %v800 = vpack.c.b16 %v758, %v756
    %v801 = vpack.c.b16 %v759, %v757
    %v802 = vpack.c.b16 %v762, %v760
    %v803 = vpack.c.b16 %v763, %v761
    %v804 = vpack.c.b16 %v766, %v764
    %v805 = vpack.c.b16 %v767, %v765
    %v806 = vpack.c.b16 %v770, %v768
    %v807 = vpack.c.b16 %v771, %v769
    %v808 = vpack.c.b16 %v774, %v772
    %v809 = vpack.c.b16 %v775, %v773
    %v810 = vpack.c.b16 %v778, %v776
    %v811 = vpack.c.b16 %v779, %v777
    %844 = vmatprep.subr.bf16.mxu0 %v781
    %845 = vmatpush1.bf16.msra.mxu0 %v780
    %846 = vmatprep.subr.bf16.mxu0 %v783
    %847 = vmatpush1.bf16.msra.mxu0 %v782
    %848 = vmatprep.subr.bf16.mxu0 %v785
    %849 = vmatpush1.bf16.msra.mxu0 %v784
    %850 = vmatprep.subr.bf16.mxu0 %v787
    %851 = vmatpush1.bf16.msra.mxu0 %v786
    %852 = vmatprep.subr.bf16.mxu0 %v789
    %853 = vmatpush1.bf16.msra.mxu0 %v788
    %854 = vmatprep.subr.bf16.mxu0 %v791
    %855 = vmatpush1.bf16.msra.mxu0 %v790
    %856 = vmatprep.subr.bf16.mxu0 %v793
    %857 = vmatpush1.bf16.msra.mxu0 %v792
    %858 = vmatprep.subr.bf16.mxu0 %v795
    %859 = vmatpush1.bf16.msra.mxu0 %v794
    %860 = vmatprep.subr.bf16.mxu0 %v797
    %861 = vmatpush1.bf16.msra.mxu0 %v796
    %862 = vmatprep.subr.bf16.mxu0 %v799
    %863 = vmatpush1.bf16.msra.mxu0 %v798
    %864 = vmatprep.subr.bf16.mxu0 %v801
    %865 = vmatpush1.bf16.msra.mxu0 %v800
    %866 = vmatprep.subr.bf16.mxu0 %v803
    %867 = vmatpush1.bf16.msra.mxu0 %v802
    %868 = vmatprep.subr.bf16.mxu0 %v805
    %869 = vmatpush1.bf16.msra.mxu0 %v804
    %870 = vmatprep.subr.bf16.mxu0 %v807
    %871 = vmatpush1.bf16.msra.mxu0 %v806
    %872 = vmatprep.subr.bf16.mxu0 %v809
    %873 = vmatpush1.bf16.msra.mxu0 %v808
    %874 = vmatprep.subr.bf16.mxu0 %v811
    %875 = vmatpush1.bf16.msra.mxu0 %v810
    %876 = vmatprep.mubr.bf16.mxu0 %v390
    %877 = vmatmul.mubr.bf16.gmra.mrb[0].mxu0 %v389
    %v878 = vpop.f32.mrb[0].mxu0
    %v879 = vadd.f32 %v677, %v878
    %v880 = vpop.f32.mrb[0].mxu0
    %v881 = vadd.f32 %v681, %v880
    %v882 = vpop.f32.mrb[0].mxu0
    %v883 = vpop.f32.mrb[0].mxu0
    %884 = vdwg.mxu0
    %v885 = vmax.f32 %v879, 0.0
    %v886 = vmax.f32 %v881, 0.0
    %v887 = vpack.c.bf16 %v885, %v885
    %v888 = vpack.c.bf16 %v886, %v886
    %v889 = vld [vmem:[#allocation9] sm:$0xff]
    %v890 = vld [vmem:[#allocation9 + $0x8] sm:$0xff]
    %v891 = vld [vmem:[#allocation9 + $0x10] sm:$0xff]
    %v892 = vld [vmem:[#allocation9 + $0x18] sm:$0xff]
    %v893 = vld [vmem:[#allocation9 + $0x20] sm:$0xff]
    %v894 = vld [vmem:[#allocation9 + $0x28] sm:$0xff]
    %v895 = vld [vmem:[#allocation9 + $0x30] sm:$0xff]
    %v896 = vld [vmem:[#allocation9 + $0x38] sm:$0xff]
    %v897 = vld [vmem:[#allocation9 + $0x40] sm:$0xff]
    %v898 = vld [vmem:[#allocation9 + $0x48] sm:$0xff]
    %v899 = vld [vmem:[#allocation9 + $0x50] sm:$0xff]
    %v900 = vld [vmem:[#allocation9 + $0x58] sm:$0xff]
    %v901 = vld [vmem:[#allocation9 + $0x60] sm:$0xff]
    %v902 = vld [vmem:[#allocation9 + $0x68] sm:$0xff]
    %v903 = vld [vmem:[#allocation9 + $0x70] sm:$0xff]
    %v904 = vld [vmem:[#allocation9 + $0x78] sm:$0xff]
    %v905 = vld [vmem:[#allocation9 + $0x80] sm:$0xff]
    %v906 = vld [vmem:[#allocation9 + $0x88] sm:$0xff]
    %v907 = vld [vmem:[#allocation9 + $0x90] sm:$0xff]
    %v908 = vld [vmem:[#allocation9 + $0x98] sm:$0xff]
    %v909 = vld [vmem:[#allocation9 + $0xa0] sm:$0xff]
    %v910 = vld [vmem:[#allocation9 + $0xa8] sm:$0xff]
    %v911 = vld [vmem:[#allocation9 + $0xb0] sm:$0xff]
    %v912 = vld [vmem:[#allocation9 + $0xb8] sm:$0xff]
    %v913 = vld [vmem:[#allocation9 + $0xc0] sm:$0xff]
    %v914 = vld [vmem:[#allocation9 + $0xc8] sm:$0xff]
    %v915 = vld [vmem:[#allocation9 + $0xd0] sm:$0xff]
    %v916 = vld [vmem:[#allocation9 + $0xd8] sm:$0xff]
    %v917 = vld [vmem:[#allocation9 + $0xe0] sm:$0xff]
    %v918 = vld [vmem:[#allocation9 + $0xe8] sm:$0xff]
    %v919 = vld [vmem:[#allocation9 + $0xf0] sm:$0xff]
    %v920 = vld [vmem:[#allocation9 + $0xf8] sm:$0xff]
    %v921 = vld [vmem:[%s10] sm:$0x3]
    %v923 = vlaneseq
    %v924 = vshrl.u32 %v923, 7
    %v925 = vsub.s32 0, %v924
    %v926 = vrot.slane %v921, %v925
    %v927 = vlaneseq
    %v928 = vshrl.u32 %v927, 7
    %v929 = vsub.s32 1, %v928
    %v930 = vrot.slane %v921, %v929
    %v965 = vunpack.c.l.b16 %v889
    %v966 = vunpack.c.h.b16 %v889
    %v967 = vunpack.c.l.b16 %v890
    %v968 = vunpack.c.h.b16 %v890
    %v969 = vunpack.c.l.b16 %v891
    %v970 = vunpack.c.h.b16 %v891
    %v971 = vunpack.c.l.b16 %v892
    %v972 = vunpack.c.h.b16 %v892
    %v973 = vunpack.c.l.b16 %v893
    %v974 = vunpack.c.h.b16 %v893
    %v975 = vunpack.c.l.b16 %v894
    %v976 = vunpack.c.h.b16 %v894
    %v977 = vunpack.c.l.b16 %v895
    %v978 = vunpack.c.h.b16 %v895
    %v979 = vunpack.c.l.b16 %v896
    %v980 = vunpack.c.h.b16 %v896
    %v981 = vunpack.c.l.b16 %v897
    %v982 = vunpack.c.h.b16 %v897
    %v983 = vunpack.c.l.b16 %v898
    %v984 = vunpack.c.h.b16 %v898
    %v985 = vunpack.c.l.b16 %v899
    %v986 = vunpack.c.h.b16 %v899
    %v987 = vunpack.c.l.b16 %v900
    %v988 = vunpack.c.h.b16 %v900
    %v989 = vunpack.c.l.b16 %v901
    %v990 = vunpack.c.h.b16 %v901
    %v991 = vunpack.c.l.b16 %v902
    %v992 = vunpack.c.h.b16 %v902
    %v993 = vunpack.c.l.b16 %v903
    %v994 = vunpack.c.h.b16 %v903
    %v995 = vunpack.c.l.b16 %v904
    %v996 = vunpack.c.h.b16 %v904
    %v997 = vunpack.c.l.b16 %v905
    %v998 = vunpack.c.h.b16 %v905
    %v999 = vunpack.c.l.b16 %v906
    %v1000 = vunpack.c.h.b16 %v906
    %v1001 = vunpack.c.l.b16 %v907
    %v1002 = vunpack.c.h.b16 %v907
    %v1003 = vunpack.c.l.b16 %v908
    %v1004 = vunpack.c.h.b16 %v908
    %v1005 = vunpack.c.l.b16 %v909
    %v1006 = vunpack.c.h.b16 %v909
    %v1007 = vunpack.c.l.b16 %v910
    %v1008 = vunpack.c.h.b16 %v910
    %v1009 = vunpack.c.l.b16 %v911
    %v1010 = vunpack.c.h.b16 %v911
    %v1011 = vunpack.c.l.b16 %v912
    %v1012 = vunpack.c.h.b16 %v912
    %v1013 = vunpack.c.l.b16 %v913
    %v1014 = vunpack.c.h.b16 %v913
    %v1015 = vunpack.c.l.b16 %v914
    %v1016 = vunpack.c.h.b16 %v914
    %v1017 = vunpack.c.l.b16 %v915
    %v1018 = vunpack.c.h.b16 %v915
    %v1019 = vunpack.c.l.b16 %v916
    %v1020 = vunpack.c.h.b16 %v916
    %v1021 = vunpack.c.l.b16 %v917
    %v1022 = vunpack.c.h.b16 %v917
    %v1023 = vunpack.c.l.b16 %v918
    %v1024 = vunpack.c.h.b16 %v918
    %v1025 = vunpack.c.l.b16 %v919
    %v1026 = vunpack.c.h.b16 %v919
    %v1027 = vunpack.c.l.b16 %v920
    %v1028 = vunpack.c.h.b16 %v920
    %v1029 = vpack.c.b16 %v967, %v965
    %v1030 = vpack.c.b16 %v968, %v966
    %v1031 = vpack.c.b16 %v971, %v969
    %v1032 = vpack.c.b16 %v972, %v970
    %v1033 = vpack.c.b16 %v975, %v973
    %v1034 = vpack.c.b16 %v976, %v974
    %v1035 = vpack.c.b16 %v979, %v977
    %v1036 = vpack.c.b16 %v980, %v978
    %v1037 = vpack.c.b16 %v983, %v981
    %v1038 = vpack.c.b16 %v984, %v982
    %v1039 = vpack.c.b16 %v987, %v985
    %v1040 = vpack.c.b16 %v988, %v986
    %v1041 = vpack.c.b16 %v991, %v989
    %v1042 = vpack.c.b16 %v992, %v990
    %v1043 = vpack.c.b16 %v995, %v993
    %v1044 = vpack.c.b16 %v996, %v994
    %v1045 = vpack.c.b16 %v999, %v997
    %v1046 = vpack.c.b16 %v1000, %v998
    %v1047 = vpack.c.b16 %v1003, %v1001
    %v1048 = vpack.c.b16 %v1004, %v1002
    %v1049 = vpack.c.b16 %v1007, %v1005
    %v1050 = vpack.c.b16 %v1008, %v1006
    %v1051 = vpack.c.b16 %v1011, %v1009
    %v1052 = vpack.c.b16 %v1012, %v1010
    %v1053 = vpack.c.b16 %v1015, %v1013
    %v1054 = vpack.c.b16 %v1016, %v1014
    %v1055 = vpack.c.b16 %v1019, %v1017
    %v1056 = vpack.c.b16 %v1020, %v1018
    %v1057 = vpack.c.b16 %v1023, %v1021
    %v1058 = vpack.c.b16 %v1024, %v1022
    %v1059 = vpack.c.b16 %v1027, %v1025
    %v1060 = vpack.c.b16 %v1028, %v1026
    %1093 = vmatprep.subr.bf16.mxu0 %v1030
    %1094 = vmatpush1.bf16.msra.mxu0 %v1029
    %1095 = vmatprep.subr.bf16.mxu0 %v1032
    %1096 = vmatpush1.bf16.msra.mxu0 %v1031
    %1097 = vmatprep.subr.bf16.mxu0 %v1034
    %1098 = vmatpush1.bf16.msra.mxu0 %v1033
    %1099 = vmatprep.subr.bf16.mxu0 %v1036
    %1100 = vmatpush1.bf16.msra.mxu0 %v1035
    %1101 = vmatprep.subr.bf16.mxu0 %v1038
    %1102 = vmatpush1.bf16.msra.mxu0 %v1037
    %1103 = vmatprep.subr.bf16.mxu0 %v1040
    %1104 = vmatpush1.bf16.msra.mxu0 %v1039
    %1105 = vmatprep.subr.bf16.mxu0 %v1042
    %1106 = vmatpush1.bf16.msra.mxu0 %v1041
    %1107 = vmatprep.subr.bf16.mxu0 %v1044
    %1108 = vmatpush1.bf16.msra.mxu0 %v1043
    %1109 = vmatprep.subr.bf16.mxu0 %v1046
    %1110 = vmatpush1.bf16.msra.mxu0 %v1045
    %1111 = vmatprep.subr.bf16.mxu0 %v1048
    %1112 = vmatpush1.bf16.msra.mxu0 %v1047
    %1113 = vmatprep.subr.bf16.mxu0 %v1050
    %1114 = vmatpush1.bf16.msra.mxu0 %v1049
    %1115 = vmatprep.subr.bf16.mxu0 %v1052
    %1116 = vmatpush1.bf16.msra.mxu0 %v1051
    %1117 = vmatprep.subr.bf16.mxu0 %v1054
    %1118 = vmatpush1.bf16.msra.mxu0 %v1053
    %1119 = vmatprep.subr.bf16.mxu0 %v1056
    %1120 = vmatpush1.bf16.msra.mxu0 %v1055
    %1121 = vmatprep.subr.bf16.mxu0 %v1058
    %1122 = vmatpush1.bf16.msra.mxu0 %v1057
    %1123 = vmatprep.subr.bf16.mxu0 %v1060
    %1124 = vmatpush1.bf16.msra.mxu0 %v1059
    %1125 = vmatprep.mubr.bf16.mxu0 %v639
    %1126 = vmatmul.mubr.bf16.gmra.mrb[0].mxu0 %v638
    %v1127 = vpop.f32.mrb[0].mxu0
    %v1128 = vadd.f32 %v926, %v1127
    %v1129 = vpop.f32.mrb[0].mxu0
    %v1130 = vadd.f32 %v930, %v1129
    %v1131 = vpop.f32.mrb[0].mxu0
    %v1132 = vpop.f32.mrb[0].mxu0
    %1133 = vdwg.mxu0
    %v1134 = vmax.f32 %v1128, 0.0
    %v1135 = vmax.f32 %v1130, 0.0
    %v1136 = vpack.c.bf16 %v1134, %v1134
    %v1137 = vpack.c.bf16 %v1135, %v1135
    %v1138 = vld [vmem:[#allocation10] sm:$0xff]
    %v1139 = vld [vmem:[#allocation10 + $0x8] sm:$0xff]
    %v1140 = vld [vmem:[#allocation10 + $0x10] sm:$0xff]
    %v1141 = vld [vmem:[#allocation10 + $0x18] sm:$0xff]
    %v1142 = vld [vmem:[#allocation10 + $0x20] sm:$0xff]
    %v1143 = vld [vmem:[#allocation10 + $0x28] sm:$0xff]
    %v1144 = vld [vmem:[#allocation10 + $0x30] sm:$0xff]
    %v1145 = vld [vmem:[#allocation10 + $0x38] sm:$0xff]
    %v1146 = vld [vmem:[#allocation10 + $0x40] sm:$0xff]
    %v1147 = vld [vmem:[#allocation10 + $0x48] sm:$0xff]
    %v1148 = vld [vmem:[#allocation10 + $0x50] sm:$0xff]
    %v1149 = vld [vmem:[#allocation10 + $0x58] sm:$0xff]
    %v1150 = vld [vmem:[#allocation10 + $0x60] sm:$0xff]
    %v1151 = vld [vmem:[#allocation10 + $0x68] sm:$0xff]
    %v1152 = vld [vmem:[#allocation10 + $0x70] sm:$0xff]
    %v1153 = vld [vmem:[#allocation10 + $0x78] sm:$0xff]
    %v1154 = vld [vmem:[#allocation10 + $0x80] sm:$0xff]
    %v1155 = vld [vmem:[#allocation10 + $0x88] sm:$0xff]
    %v1156 = vld [vmem:[#allocation10 + $0x90] sm:$0xff]
    %v1157 = vld [vmem:[#allocation10 + $0x98] sm:$0xff]
    %v1158 = vld [vmem:[#allocation10 + $0xa0] sm:$0xff]
    %v1159 = vld [vmem:[#allocation10 + $0xa8] sm:$0xff]
    %v1160 = vld [vmem:[#allocation10 + $0xb0] sm:$0xff]
    %v1161 = vld [vmem:[#allocation10 + $0xb8] sm:$0xff]
    %v1162 = vld [vmem:[#allocation10 + $0xc0] sm:$0xff]
    %v1163 = vld [vmem:[#allocation10 + $0xc8] sm:$0xff]
    %v1164 = vld [vmem:[#allocation10 + $0xd0] sm:$0xff]
    %v1165 = vld [vmem:[#allocation10 + $0xd8] sm:$0xff]
    %v1166 = vld [vmem:[#allocation10 + $0xe0] sm:$0xff]
    %v1167 = vld [vmem:[#allocation10 + $0xe8] sm:$0xff]
    %v1168 = vld [vmem:[#allocation10 + $0xf0] sm:$0xff]
    %v1169 = vld [vmem:[#allocation10 + $0xf8] sm:$0xff]
    %v1170 = vld [vmem:[%s12] sm:$0x3]
    %v1172 = vlaneseq
    %v1173 = vshrl.u32 %v1172, 7
    %v1174 = vsub.s32 0, %v1173
    %v1175 = vrot.slane %v1170, %v1174
    %v1176 = vlaneseq
    %v1177 = vshrl.u32 %v1176, 7
    %v1178 = vsub.s32 1, %v1177
    %v1179 = vrot.slane %v1170, %v1178
    %v1214 = vunpack.c.l.b16 %v1138
    %v1215 = vunpack.c.h.b16 %v1138
    %v1216 = vunpack.c.l.b16 %v1139
    %v1217 = vunpack.c.h.b16 %v1139
    %v1218 = vunpack.c.l.b16 %v1140
    %v1219 = vunpack.c.h.b16 %v1140
    %v1220 = vunpack.c.l.b16 %v1141
    %v1221 = vunpack.c.h.b16 %v1141
    %v1222 = vunpack.c.l.b16 %v1142
    %v1223 = vunpack.c.h.b16 %v1142
    %v1224 = vunpack.c.l.b16 %v1143
    %v1225 = vunpack.c.h.b16 %v1143
    %v1226 = vunpack.c.l.b16 %v1144
    %v1227 = vunpack.c.h.b16 %v1144
    %v1228 = vunpack.c.l.b16 %v1145
    %v1229 = vunpack.c.h.b16 %v1145
    %v1230 = vunpack.c.l.b16 %v1146
    %v1231 = vunpack.c.h.b16 %v1146
    %v1232 = vunpack.c.l.b16 %v1147
    %v1233 = vunpack.c.h.b16 %v1147
    %v1234 = vunpack.c.l.b16 %v1148
    %v1235 = vunpack.c.h.b16 %v1148
    %v1236 = vunpack.c.l.b16 %v1149
    %v1237 = vunpack.c.h.b16 %v1149
    %v1238 = vunpack.c.l.b16 %v1150
    %v1239 = vunpack.c.h.b16 %v1150
    %v1240 = vunpack.c.l.b16 %v1151
    %v1241 = vunpack.c.h.b16 %v1151
    %v1242 = vunpack.c.l.b16 %v1152
    %v1243 = vunpack.c.h.b16 %v1152
    %v1244 = vunpack.c.l.b16 %v1153
    %v1245 = vunpack.c.h.b16 %v1153
    %v1246 = vunpack.c.l.b16 %v1154
    %v1247 = vunpack.c.h.b16 %v1154
    %v1248 = vunpack.c.l.b16 %v1155
    %v1249 = vunpack.c.h.b16 %v1155
    %v1250 = vunpack.c.l.b16 %v1156
    %v1251 = vunpack.c.h.b16 %v1156
    %v1252 = vunpack.c.l.b16 %v1157
    %v1253 = vunpack.c.h.b16 %v1157
    %v1254 = vunpack.c.l.b16 %v1158
    %v1255 = vunpack.c.h.b16 %v1158
    %v1256 = vunpack.c.l.b16 %v1159
    %v1257 = vunpack.c.h.b16 %v1159
    %v1258 = vunpack.c.l.b16 %v1160
    %v1259 = vunpack.c.h.b16 %v1160
    %v1260 = vunpack.c.l.b16 %v1161
    %v1261 = vunpack.c.h.b16 %v1161
    %v1262 = vunpack.c.l.b16 %v1162
    %v1263 = vunpack.c.h.b16 %v1162
    %v1264 = vunpack.c.l.b16 %v1163
    %v1265 = vunpack.c.h.b16 %v1163
    %v1266 = vunpack.c.l.b16 %v1164
    %v1267 = vunpack.c.h.b16 %v1164
    %v1268 = vunpack.c.l.b16 %v1165
    %v1269 = vunpack.c.h.b16 %v1165
    %v1270 = vunpack.c.l.b16 %v1166
    %v1271 = vunpack.c.h.b16 %v1166
    %v1272 = vunpack.c.l.b16 %v1167
    %v1273 = vunpack.c.h.b16 %v1167
    %v1274 = vunpack.c.l.b16 %v1168
    %v1275 = vunpack.c.h.b16 %v1168
    %v1276 = vunpack.c.l.b16 %v1169
    %v1277 = vunpack.c.h.b16 %v1169
    %v1278 = vpack.c.b16 %v1216, %v1214
    %v1279 = vpack.c.b16 %v1217, %v1215
    %v1280 = vpack.c.b16 %v1220, %v1218
    %v1281 = vpack.c.b16 %v1221, %v1219
    %v1282 = vpack.c.b16 %v1224, %v1222
    %v1283 = vpack.c.b16 %v1225, %v1223
    %v1284 = vpack.c.b16 %v1228, %v1226
    %v1285 = vpack.c.b16 %v1229, %v1227
    %v1286 = vpack.c.b16 %v1232, %v1230
    %v1287 = vpack.c.b16 %v1233, %v1231
    %v1288 = vpack.c.b16 %v1236, %v1234
    %v1289 = vpack.c.b16 %v1237, %v1235
    %v1290 = vpack.c.b16 %v1240, %v1238
    %v1291 = vpack.c.b16 %v1241, %v1239
    %v1292 = vpack.c.b16 %v1244, %v1242
    %v1293 = vpack.c.b16 %v1245, %v1243
    %v1294 = vpack.c.b16 %v1248, %v1246
    %v1295 = vpack.c.b16 %v1249, %v1247
    %v1296 = vpack.c.b16 %v1252, %v1250
    %v1297 = vpack.c.b16 %v1253, %v1251
    %v1298 = vpack.c.b16 %v1256, %v1254
    %v1299 = vpack.c.b16 %v1257, %v1255
    %v1300 = vpack.c.b16 %v1260, %v1258
    %v1301 = vpack.c.b16 %v1261, %v1259
    %v1302 = vpack.c.b16 %v1264, %v1262
    %v1303 = vpack.c.b16 %v1265, %v1263
    %v1304 = vpack.c.b16 %v1268, %v1266
    %v1305 = vpack.c.b16 %v1269, %v1267
    %v1306 = vpack.c.b16 %v1272, %v1270
    %v1307 = vpack.c.b16 %v1273, %v1271
    %v1308 = vpack.c.b16 %v1276, %v1274
    %v1309 = vpack.c.b16 %v1277, %v1275
    %1342 = vmatprep.subr.bf16.mxu0 %v1279
    %1343 = vmatpush1.bf16.msra.mxu0 %v1278
    %1344 = vmatprep.subr.bf16.mxu0 %v1281
    %1345 = vmatpush1.bf16.msra.mxu0 %v1280
    %1346 = vmatprep.subr.bf16.mxu0 %v1283
    %1347 = vmatpush1.bf16.msra.mxu0 %v1282
    %1348 = vmatprep.subr.bf16.mxu0 %v1285
    %1349 = vmatpush1.bf16.msra.mxu0 %v1284
    %1350 = vmatprep.subr.bf16.mxu0 %v1287
    %1351 = vmatpush1.bf16.msra.mxu0 %v1286
    %1352 = vmatprep.subr.bf16.mxu0 %v1289
    %1353 = vmatpush1.bf16.msra.mxu0 %v1288
    %1354 = vmatprep.subr.bf16.mxu0 %v1291
    %1355 = vmatpush1.bf16.msra.mxu0 %v1290
    %1356 = vmatprep.subr.bf16.mxu0 %v1293
    %1357 = vmatpush1.bf16.msra.mxu0 %v1292
    %1358 = vmatprep.subr.bf16.mxu0 %v1295
    %1359 = vmatpush1.bf16.msra.mxu0 %v1294
    %1360 = vmatprep.subr.bf16.mxu0 %v1297
    %1361 = vmatpush1.bf16.msra.mxu0 %v1296
    %1362 = vmatprep.subr.bf16.mxu0 %v1299
    %1363 = vmatpush1.bf16.msra.mxu0 %v1298
    %1364 = vmatprep.subr.bf16.mxu0 %v1301
    %1365 = vmatpush1.bf16.msra.mxu0 %v1300
    %1366 = vmatprep.subr.bf16.mxu0 %v1303
    %1367 = vmatpush1.bf16.msra.mxu0 %v1302
    %1368 = vmatprep.subr.bf16.mxu0 %v1305
    %1369 = vmatpush1.bf16.msra.mxu0 %v1304
    %1370 = vmatprep.subr.bf16.mxu0 %v1307
    %1371 = vmatpush1.bf16.msra.mxu0 %v1306
    %1372 = vmatprep.subr.bf16.mxu0 %v1309
    %1373 = vmatpush1.bf16.msra.mxu0 %v1308
    %1374 = vmatprep.mubr.bf16.mxu0 %v888
    %1375 = vmatmul.mubr.bf16.gmra.mrb[0].mxu0 %v887
    %v1376 = vpop.f32.mrb[0].mxu0
    %v1377 = vadd.f32 %v1175, %v1376
    %v1378 = vpop.f32.mrb[0].mxu0
    %v1379 = vadd.f32 %v1179, %v1378
    %v1380 = vpop.f32.mrb[0].mxu0
    %v1381 = vpop.f32.mrb[0].mxu0
    %1382 = vdwg.mxu0
    %v1383 = vmax.f32 %v1377, 0.0
    %v1384 = vmax.f32 %v1379, 0.0
    %v1385 = vpack.c.bf16 %v1383, %v1383
    %v1386 = vpack.c.bf16 %v1384, %v1384
    %v1387 = vld [vmem:[%s13] sm:$0xf]
    %v1388 = vld [vmem:[%s13 + $0x4] sm:$0xf]
    %v1389 = vld [vmem:[%s13 + $0x8] sm:$0xf]
    %v1390 = vld [vmem:[%s13 + $0xc] sm:$0xf]
    %v1391 = vld [vmem:[%s13 + $0x10] sm:$0xf]
    %v1392 = vld [vmem:[%s13 + $0x14] sm:$0xf]
    %v1393 = vld [vmem:[%s13 + $0x18] sm:$0xf]
    %v1394 = vld [vmem:[%s13 + $0x1c] sm:$0xf]
    %v1395 = vld [vmem:[%s13 + $0x20] sm:$0xf]
    %v1396 = vld [vmem:[%s13 + $0x24] sm:$0xf]
    %v1397 = vld [vmem:[%s13 + $0x28] sm:$0xf]
    %v1398 = vld [vmem:[%s13 + $0x2c] sm:$0xf]
    %v1399 = vld [vmem:[%s13 + $0x30] sm:$0xf]
    %v1400 = vld [vmem:[%s13 + $0x34] sm:$0xf]
    %v1401 = vld [vmem:[%s13 + $0x38] sm:$0xf]
    %v1402 = vld [vmem:[%s13 + $0x3c] sm:$0xf]
    %v1403 = vld [vmem:[%s13 + $0x40] sm:$0xf]
    %v1404 = vld [vmem:[%s13 + $0x44] sm:$0xf]
    %v1405 = vld [vmem:[%s13 + $0x48] sm:$0xf]
    %v1406 = vld [vmem:[%s13 + $0x4c] sm:$0xf]
    %v1407 = vld [vmem:[%s13 + $0x50] sm:$0xf]
    %v1408 = vld [vmem:[%s13 + $0x54] sm:$0xf]
    %v1409 = vld [vmem:[%s13 + $0x58] sm:$0xf]
    %v1410 = vld [vmem:[%s13 + $0x5c] sm:$0xf]
    %v1411 = vld [vmem:[%s13 + $0x60] sm:$0xf]
    %v1412 = vld [vmem:[%s13 + $0x64] sm:$0xf]
    %v1413 = vld [vmem:[%s13 + $0x68] sm:$0xf]
    %v1414 = vld [vmem:[%s13 + $0x6c] sm:$0xf]
    %v1415 = vld [vmem:[%s13 + $0x70] sm:$0xf]
    %v1416 = vld [vmem:[%s13 + $0x74] sm:$0xf]
    %v1417 = vld [vmem:[%s13 + $0x78] sm:$0xf]
    %v1418 = vld [vmem:[%s13 + $0x7c] sm:$0xf]
    %v1419 = vld [vmem:[%s14] sm:$0xf]
    %v1420 = vld [vmem:[%s14 + $0x4] sm:$0xf]
    %v1421 = vld [vmem:[%s14 + $0x8] sm:$0xf]
    %v1422 = vld [vmem:[%s14 + $0xc] sm:$0xf]
    %v1423 = vld [vmem:[%s14 + $0x10] sm:$0xf]
    %v1424 = vld [vmem:[%s14 + $0x14] sm:$0xf]
    %v1425 = vld [vmem:[%s14 + $0x18] sm:$0xf]
    %v1426 = vld [vmem:[%s14 + $0x1c] sm:$0xf]
    %v1427 = vld [vmem:[%s14 + $0x20] sm:$0xf]
    %v1428 = vld [vmem:[%s14 + $0x24] sm:$0xf]
    %v1429 = vld [vmem:[%s14 + $0x28] sm:$0xf]
    %v1430 = vld [vmem:[%s14 + $0x2c] sm:$0xf]
    %v1431 = vld [vmem:[%s14 + $0x30] sm:$0xf]
    %v1432 = vld [vmem:[%s14 + $0x34] sm:$0xf]
    %v1433 = vld [vmem:[%s14 + $0x38] sm:$0xf]
    %v1434 = vld [vmem:[%s14 + $0x3c] sm:$0xf]
    %v1435 = vld [vmem:[%s14 + $0x40] sm:$0xf]
    %v1436 = vld [vmem:[%s14 + $0x44] sm:$0xf]
    %v1437 = vld [vmem:[%s14 + $0x48] sm:$0xf]
    %v1438 = vld [vmem:[%s14 + $0x4c] sm:$0xf]
    %v1439 = vld [vmem:[%s14 + $0x50] sm:$0xf]
    %v1440 = vld [vmem:[%s14 + $0x54] sm:$0xf]
    %v1441 = vld [vmem:[%s14 + $0x58] sm:$0xf]
    %v1442 = vld [vmem:[%s14 + $0x5c] sm:$0xf]
    %v1443 = vld [vmem:[%s14 + $0x60] sm:$0xf]
    %v1444 = vld [vmem:[%s14 + $0x64] sm:$0xf]
    %v1445 = vld [vmem:[%s14 + $0x68] sm:$0xf]
    %v1446 = vld [vmem:[%s14 + $0x6c] sm:$0xf]
    %v1447 = vld [vmem:[%s14 + $0x70] sm:$0xf]
    %v1448 = vld [vmem:[%s14 + $0x74] sm:$0xf]
    %v1449 = vld [vmem:[%s14 + $0x78] sm:$0xf]
    %v1450 = vld [vmem:[%s14 + $0x7c] sm:$0xf]
    %v1483 = vunpack.c.l.b16 %v1419
    %v1484 = vunpack.c.l.b16 %v1420
    %v1485 = vunpack.c.l.b16 %v1421
    %v1486 = vunpack.c.l.b16 %v1422
    %v1487 = vunpack.c.l.b16 %v1423
    %v1488 = vunpack.c.l.b16 %v1424
    %v1489 = vunpack.c.l.b16 %v1425
    %v1490 = vunpack.c.l.b16 %v1426
    %v1491 = vunpack.c.l.b16 %v1427
    %v1492 = vunpack.c.l.b16 %v1428
    %v1493 = vunpack.c.l.b16 %v1429
    %v1494 = vunpack.c.l.b16 %v1430
    %v1495 = vunpack.c.l.b16 %v1431
    %v1496 = vunpack.c.l.b16 %v1432
    %v1497 = vunpack.c.l.b16 %v1433
    %v1498 = vunpack.c.l.b16 %v1434
    %v1499 = vunpack.c.l.b16 %v1435
    %v1500 = vunpack.c.l.b16 %v1436
    %v1501 = vunpack.c.l.b16 %v1437
    %v1502 = vunpack.c.l.b16 %v1438
    %v1503 = vunpack.c.l.b16 %v1439
    %v1504 = vunpack.c.l.b16 %v1440
    %v1505 = vunpack.c.l.b16 %v1441
    %v1506 = vunpack.c.l.b16 %v1442
    %v1507 = vunpack.c.l.b16 %v1443
    %v1508 = vunpack.c.l.b16 %v1444
    %v1509 = vunpack.c.l.b16 %v1445
    %v1510 = vunpack.c.l.b16 %v1446
    %v1511 = vunpack.c.l.b16 %v1447
    %v1512 = vunpack.c.l.b16 %v1448
    %v1513 = vunpack.c.l.b16 %v1449
    %v1514 = vunpack.c.l.b16 %v1450
    %v1515 = vpack.c.b16 %v1484, %v1483
    %v1516 = vpack.c.b16 %v1486, %v1485
    %v1517 = vpack.c.b16 %v1488, %v1487
    %v1518 = vpack.c.b16 %v1490, %v1489
    %v1519 = vpack.c.b16 %v1492, %v1491
    %v1520 = vpack.c.b16 %v1494, %v1493
    %v1521 = vpack.c.b16 %v1496, %v1495
    %v1522 = vpack.c.b16 %v1498, %v1497
    %v1523 = vpack.c.b16 %v1500, %v1499
    %v1524 = vpack.c.b16 %v1502, %v1501
    %v1525 = vpack.c.b16 %v1504, %v1503
    %v1526 = vpack.c.b16 %v1506, %v1505
    %v1527 = vpack.c.b16 %v1508, %v1507
    %v1528 = vpack.c.b16 %v1510, %v1509
    %v1529 = vpack.c.b16 %v1512, %v1511
    %v1530 = vpack.c.b16 %v1514, %v1513
    %1547 = vmatprep.subr.bf16.mxu0 0
    %1548 = vmatpush1.bf16.msra.mxu0 %v1515
    %1549 = vmatprep.subr.bf16.mxu0 0
    %1550 = vmatpush1.bf16.msra.mxu0 %v1516
    %1551 = vmatprep.subr.bf16.mxu0 0
    %1552 = vmatpush1.bf16.msra.mxu0 %v1517
    %1553 = vmatprep.subr.bf16.mxu0 0
    %1554 = vmatpush1.bf16.msra.mxu0 %v1518
    %1555 = vmatprep.subr.bf16.mxu0 0
    %1556 = vmatpush1.bf16.msra.mxu0 %v1519
    %1557 = vmatprep.subr.bf16.mxu0 0
    %1558 = vmatpush1.bf16.msra.mxu0 %v1520
    %1559 = vmatprep.subr.bf16.mxu0 0
    %1560 = vmatpush1.bf16.msra.mxu0 %v1521
    %1561 = vmatprep.subr.bf16.mxu0 0
    %1562 = vmatpush1.bf16.msra.mxu0 %v1522
    %1563 = vmatprep.subr.bf16.mxu0 0
    %1564 = vmatpush1.bf16.msra.mxu0 %v1523
    %1565 = vmatprep.subr.bf16.mxu0 0
    %1566 = vmatpush1.bf16.msra.mxu0 %v1524
    %1567 = vmatprep.subr.bf16.mxu0 0
    %1568 = vmatpush1.bf16.msra.mxu0 %v1525
    %1569 = vmatprep.subr.bf16.mxu0 0
    %1570 = vmatpush1.bf16.msra.mxu0 %v1526
    %1571 = vmatprep.subr.bf16.mxu0 0
    %1572 = vmatpush1.bf16.msra.mxu0 %v1527
    %1573 = vmatprep.subr.bf16.mxu0 0
    %1574 = vmatpush1.bf16.msra.mxu0 %v1528
    %1575 = vmatprep.subr.bf16.mxu0 0
    %1576 = vmatpush1.bf16.msra.mxu0 %v1529
    %1577 = vmatprep.subr.bf16.mxu0 0
    %1578 = vmatpush1.bf16.msra.mxu0 %v1530
    %1579 = vmatprep.mubr.bf16.mxu0 %v1386
    %1580 = vmatmul.mubr.bf16.gmra.mrb[0].mxu0 %v1385
    %v1581 = vpop.f32.mrb[0].mxu0
    %v1582 = vadd.f32 0.0, %v1581
    %v1583 = vpop.f32.mrb[0].mxu0
    %v1584 = vpop.f32.mrb[0].mxu0
    %v1585 = vpop.f32.mrb[0].mxu0
    %1586 = vdwg.mxu0
    %v1619 = vunpack.c.l.b16 %v1387
    %v1620 = vunpack.c.l.b16 %v1388
    %v1621 = vunpack.c.l.b16 %v1389
    %v1622 = vunpack.c.l.b16 %v1390
    %v1623 = vunpack.c.l.b16 %v1391
    %v1624 = vunpack.c.l.b16 %v1392
    %v1625 = vunpack.c.l.b16 %v1393
    %v1626 = vunpack.c.l.b16 %v1394
    %v1627 = vunpack.c.l.b16 %v1395
    %v1628 = vunpack.c.l.b16 %v1396
    %v1629 = vunpack.c.l.b16 %v1397
    %v1630 = vunpack.c.l.b16 %v1398
    %v1631 = vunpack.c.l.b16 %v1399
    %v1632 = vunpack.c.l.b16 %v1400
    %v1633 = vunpack.c.l.b16 %v1401
    %v1634 = vunpack.c.l.b16 %v1402
    %v1635 = vunpack.c.l.b16 %v1403
    %v1636 = vunpack.c.l.b16 %v1404
    %v1637 = vunpack.c.l.b16 %v1405
    %v1638 = vunpack.c.l.b16 %v1406
    %v1639 = vunpack.c.l.b16 %v1407
    %v1640 = vunpack.c.l.b16 %v1408
    %v1641 = vunpack.c.l.b16 %v1409
    %v1642 = vunpack.c.l.b16 %v1410
    %v1643 = vunpack.c.l.b16 %v1411
    %v1644 = vunpack.c.l.b16 %v1412
    %v1645 = vunpack.c.l.b16 %v1413
    %v1646 = vunpack.c.l.b16 %v1414
    %v1647 = vunpack.c.l.b16 %v1415
    %v1648 = vunpack.c.l.b16 %v1416
    %v1649 = vunpack.c.l.b16 %v1417
    %v1650 = vunpack.c.l.b16 %v1418
    %v1651 = vpack.c.b16 %v1620, %v1619
    %v1652 = vpack.c.b16 %v1622, %v1621
    %v1653 = vpack.c.b16 %v1624, %v1623
    %v1654 = vpack.c.b16 %v1626, %v1625
    %v1655 = vpack.c.b16 %v1628, %v1627
    %v1656 = vpack.c.b16 %v1630, %v1629
    %v1657 = vpack.c.b16 %v1632, %v1631
    %v1658 = vpack.c.b16 %v1634, %v1633
    %v1659 = vpack.c.b16 %v1636, %v1635
    %v1660 = vpack.c.b16 %v1638, %v1637
    %v1661 = vpack.c.b16 %v1640, %v1639
    %v1662 = vpack.c.b16 %v1642, %v1641
    %v1663 = vpack.c.b16 %v1644, %v1643
    %v1664 = vpack.c.b16 %v1646, %v1645
    %v1665 = vpack.c.b16 %v1648, %v1647
    %v1666 = vpack.c.b16 %v1650, %v1649
    %1683 = vmatprep.subr.bf16.mxu0 0
    %1684 = vmatpush1.bf16.msra.mxu0 %v1651
    %1685 = vmatprep.subr.bf16.mxu0 0
    %1686 = vmatpush1.bf16.msra.mxu0 %v1652
    %1687 = vmatprep.subr.bf16.mxu0 0
    %1688 = vmatpush1.bf16.msra.mxu0 %v1653
    %1689 = vmatprep.subr.bf16.mxu0 0
    %1690 = vmatpush1.bf16.msra.mxu0 %v1654
    %1691 = vmatprep.subr.bf16.mxu0 0
    %1692 = vmatpush1.bf16.msra.mxu0 %v1655
    %1693 = vmatprep.subr.bf16.mxu0 0
    %1694 = vmatpush1.bf16.msra.mxu0 %v1656
    %1695 = vmatprep.subr.bf16.mxu0 0
    %1696 = vmatpush1.bf16.msra.mxu0 %v1657
    %1697 = vmatprep.subr.bf16.mxu0 0
    %1698 = vmatpush1.bf16.msra.mxu0 %v1658
    %1699 = vmatprep.subr.bf16.mxu0 0
    %1700 = vmatpush1.bf16.msra.mxu0 %v1659
    %1701 = vmatprep.subr.bf16.mxu0 0
    %1702 = vmatpush1.bf16.msra.mxu0 %v1660
    %1703 = vmatprep.subr.bf16.mxu0 0
    %1704 = vmatpush1.bf16.msra.mxu0 %v1661
    %1705 = vmatprep.subr.bf16.mxu0 0
    %1706 = vmatpush1.bf16.msra.mxu0 %v1662
    %1707 = vmatprep.subr.bf16.mxu0 0
    %1708 = vmatpush1.bf16.msra.mxu0 %v1663
    %1709 = vmatprep.subr.bf16.mxu0 0
    %1710 = vmatpush1.bf16.msra.mxu0 %v1664
    %1711 = vmatprep.subr.bf16.mxu0 0
    %1712 = vmatpush1.bf16.msra.mxu0 %v1665
    %1713 = vmatprep.subr.bf16.mxu0 0
    %1714 = vmatpush1.bf16.msra.mxu0 %v1666
    %1715 = vmatprep.mubr.bf16.mxu0 %v1137
    %1716 = vmatmul.mubr.bf16.gmra.mrb[0].mxu0 %v1136
    %v1717 = vpop.f32.mrb[0].mxu0
    %v1718 = vadd.f32 %v1582, %v1717
    %v1719 = vpop.f32.mrb[0].mxu0
    %v1720 = vpop.f32.mrb[0].mxu0
    %v1721 = vpop.f32.mrb[0].mxu0
    %1722 = vdwg.mxu0
    %v1723 = vld [vmem:[%s15] sm:$0x1]
    %v1725 = vlaneseq
    %v1726 = vshrl.u32 %v1725, 7
    %v1727 = vsub.s32 0, %v1726
    %v1728 = vrot.slane %v1723, %v1727
    %v1730 = vadd.f32 %v1718, %v1728
    %vm1731 = vcmask 15360
    %1732 = vst.msk [vmem:[%s16] sm:$0xff] %vm1731, %v1730
    // Predicated region
    $region90: #{qnetwork_forward.1} parent=1 // pred_check
      _
    $region91: #{qnetwork_forward.1} parent=1 // pred_check_branch
      %1734 = sbr.rel (0) target = $region93
    $region92: #{qnetwork_forward.1} parent=1 // pred_region
      _
    $region93: #{qnetwork_forward.1} parent=1 // pred_fallthru
      _
    // Predicated region
    $region94: #{qnetwork_forward.1} parent=1 // pred_check
      _
    $region95: #{qnetwork_forward.1} parent=1 // pred_check_branch
      %1736 = sbr.rel (0) target = $region97
    $region96: #{qnetwork_forward.1} parent=1 // pred_region
      _
    $region97: #{qnetwork_forward.1} parent=1 // pred_fallthru
      _
    %1737 = vsyncpa [#allocation3], 1
    %1738 = vsyncpa [#allocation5], 1
    %1739 = vsyncpa [#allocation8], 1
    %1740 = vsyncpa [#allocation11], 1

</llo_original>
